<compile_context>
chip_gen: v7x
topology: tpu7x:2x2x1
jax: 0.10.0
libtpu: 0.0.40
codegen_flags: <defaults>
</compile_context>

<pallas_src>
import math
from functools import partial

import jax
import jax.numpy as jnp
from jax.experimental import pallas as pl
from jax.experimental.pallas import tpu as pltpu

context_length = 14
dropout = 0.2   # nn.Dropout is identity in eval mode; see TODO in kernel.
LN_EPS = 1e-5   # torch.nn.LayerNorm default eps


def _layer_norm(v, gamma, beta):
    mu = jnp.mean(v, axis=-1, keepdims=True)
    c = v - mu
    var = jnp.mean(c * c, axis=-1, keepdims=True)
    return c * jax.lax.rsqrt(var + LN_EPS) * gamma + beta


def _attention_block_kernel(num_heads,
                            x_ref,       # (Bblk, L, N) f32
                            wqkv_ref,    # (N, 3N)  bf16, N**-0.5 folded into Wq cols
                            wo_ref,      # (N, N)   bf16
                            w1_ref,      # (N, 4N)  bf16
                            w2_ref,      # (4N, N)  bf16
                            vec_ref,     # (8, N)   f32: g1, beta1, b_o, g2, beta2, b_ff2
                            bff1_ref,    # (1, 4N)  f32
                            o_ref):      # (Bblk, L, N) f32
    Bblk, L, N = x_ref.shape
    H = N // num_heads
    M = Bblk * L

    x = x_ref[...].reshape(M, N)                       # flatten batch block: M rows of MXU work

    g1 = vec_ref[0:1, :]
    beta1 = vec_ref[1:2, :]
    b_o = vec_ref[2:3, :]
    g2 = vec_ref[3:4, :]
    beta2 = vec_ref[4:5, :]
    b_ff2 = vec_ref[5:6, :]
    b_ff1 = bff1_ref[...]

    # ---- norm1 ----
    xn = _layer_norm(x, g1, beta1)

    # ---- fused QKV projection for all heads: one (M, N) x (N, 3N) bf16 MXU matmul ----
    qkv = jnp.dot(xn.astype(jnp.bfloat16), wqkv_ref[...],
                  preferred_element_type=jnp.float32)   # (M, 3N) f32 accumulate
    q = qkv[:, :N]                                      # model_size**-0.5 pre-folded into Wq
    k = qkv[:, N:2 * N]
    v = qkv[:, 2 * N:]

    # ---- causal additive bias built in-kernel (no DMA'd operand) ----
    rows = jax.lax.broadcasted_iota(jnp.int32, (L, L), 0)
    cols = jax.lax.broadcasted_iota(jnp.int32, (L, L), 1)
    bias = jnp.where(rows >= cols, 0.0, -1e30).astype(jnp.float32)

    # ---- per-head causal attention with Wo-row accumulation (no lane concat) ----
    # Static unroll: Bblk and num_heads are small; the (L, H) slices are cheap at L=8.
    batch_rows = []
    for b in range(Bblk):
        rs = slice(b * L, (b + 1) * L)
        qb = q[rs].astype(jnp.bfloat16)
        kb = k[rs].astype(jnp.bfloat16)
        vb = v[rs].astype(jnp.bfloat16)
        acc = jnp.zeros((L, N), jnp.float32)            # lane-dense per-batch accumulator
        for h in range(num_heads):
            cs = slice(h * H, (h + 1) * H)
            # Contract trailing dims directly (no explicit transpose / XLU relayout).
            s = jax.lax.dot_general(qb[:, cs], kb[:, cs],
                                    (((1,), (1,)), ((), ())),
                                    preferred_element_type=jnp.float32) + bias  # (L, L)
            m = jnp.max(s, axis=-1, keepdims=True)
            p = jnp.exp(s - m)
            denom = jnp.sum(p, axis=-1, keepdims=True)
            p = p * pl.reciprocal(denom, approx=True)   # EUP slot, effectively free
            # TODO(synk): attention/output dropout are identity here (eval mode); training
            # dropout needs pltpu.prng_seed + pltpu.stateful_bernoulli + 1/(1-p) rescale.
            head = jnp.dot(p.astype(jnp.bfloat16), vb[:, cs],
                           preferred_element_type=jnp.float32)               # (L, H)
            # Accumulate the output projection per head: lane-dense (L, N) add on the VPU.
            acc = acc + jnp.dot(head.astype(jnp.bfloat16), wo_ref[cs, :],
                                preferred_element_type=jnp.float32)          # (L, N)
        batch_rows.append(acc)
    mha = jnp.concatenate(batch_rows, axis=0) + b_o     # (M, N): sublane-axis concat only

    # ---- residual 1 ----
    x1 = x + mha

    # ---- norm2 + feed-forward + residual (FFN dropout = identity) ----
    xn2 = _layer_norm(x1, g2, beta2)
    hid = jnp.dot(xn2.astype(jnp.bfloat16), w1_ref[...],
                  preferred_element_type=jnp.float32) + b_ff1
    hid = jnp.maximum(hid, 0.0)                         # ReLU
    ffn = jnp.dot(hid.astype(jnp.bfloat16), w2_ref[...],
                  preferred_element_type=jnp.float32) + b_ff2

    o_ref[...] = (x1 + ffn).reshape(Bblk, L, N).astype(o_ref.dtype)


def attention_block(x, params, num_heads, *, batch_block=None):
    """x: (B, L, N) f32; params: fused/packed weights (see __main__) -> (B, L, N) f32."""
    B, L, N = x.shape
    assert L <= context_length, "sequence length must not exceed context_length"
    assert N % num_heads == 0
    if batch_block is None:
        batch_block = B                     # small-batch demo: everything in one grid step
    assert B % batch_block == 0
    n_steps = B // batch_block

    def const_spec(*shape):
        # Constant index map: the block is never re-fetched across grid steps.
        return pl.BlockSpec(shape, lambda g: (0,) * len(shape))

    return pl.pallas_call(
        partial(_attention_block_kernel, num_heads),
        out_shape=jax.ShapeDtypeStruct((B, L, N), jnp.float32),
        grid_spec=pltpu.PrefetchScalarGridSpec(
            num_scalar_prefetch=0,
            grid=(n_steps,),
            in_specs=[
                pl.BlockSpec((batch_block, L, N), lambda g: (g, 0, 0)),   # x
                const_spec(N, 3 * N),                                     # fused Wqkv (bf16)
                const_spec(N, N),                                         # W_o (bf16)
                const_spec(N, 4 * N),                                     # FFN W1 (bf16)
                const_spec(4 * N, N),                                     # FFN W2 (bf16)
                const_spec(8, N),                                         # packed (1,N) vectors
                const_spec(1, 4 * N),                                     # b_ff1
            ],
            out_specs=pl.BlockSpec((batch_block, L, N), lambda g: (g, 0, 0)),
        ),
        # Sequential grid: do NOT megacore-shard a tiny batch (it duplicates the
        # weight DMA into both v7x TensorCores for no compute benefit).
        compiler_params=pltpu.CompilerParams(
            dimension_semantics=("arbitrary",)),
    )(x,
      params["w_qkv"], params["w_o"],
      params["w_ff1"], params["w_ff2"],
      params["vec_pack"], params["b_ff1"])


if __name__ == "__main__":
    # Small shapes consistent with the module: B=2, L=8 (<= context_length=14),
    # model_size=128 (lane-dense), num_heads=4 -> head_size=32.
    B, L = 2, 8
    model_size, num_heads = 128, 4
    head_size = model_size // num_heads

    key = jax.random.PRNGKey(0)
    keys = jax.random.split(key, 24)
    ki = iter(range(24))

    def linear_w(k, out_dim, in_dim):
        bound = 1.0 / math.sqrt(in_dim)
        return jax.random.uniform(k, (out_dim, in_dim), minval=-bound, maxval=bound,
                                  dtype=jnp.float32)

    def linear_b(k, out_dim, in_dim):
        bound = 1.0 / math.sqrt(in_dim)
        return jax.random.uniform(k, (out_dim,), minval=-bound, maxval=bound,
                                  dtype=jnp.float32)

    x = jax.random.normal(keys[next(ki)], (B, L, model_size), dtype=jnp.float32)

    # Per-head PyTorch-style (H, N) weights, transposed to (N, H) and fused head-major.
    wq_heads = [linear_w(keys[next(ki)], head_size, model_size).T for _ in range(num_heads)]
    wk_heads = [linear_w(keys[next(ki)], head_size, model_size).T for _ in range(num_heads)]
    wv_heads = [linear_w(keys[next(ki)], head_size, model_size).T for _ in range(num_heads)]
    wq_cat = jnp.concatenate(wq_heads, axis=1)                    # (N, N)
    wk_cat = jnp.concatenate(wk_heads, axis=1)                    # (N, N)
    wv_cat = jnp.concatenate(wv_heads, axis=1)                    # (N, N)

    w_o = linear_w(keys[next(ki)], model_size, model_size).T      # (N, N)
    b_o = linear_b(keys[next(ki)], model_size, model_size).reshape(1, model_size)

    w_ff1 = linear_w(keys[next(ki)], 4 * model_size, model_size).T          # (N, 4N)
    b_ff1 = linear_b(keys[next(ki)], 4 * model_size, model_size).reshape(1, 4 * model_size)
    w_ff2 = linear_w(keys[next(ki)], model_size, 4 * model_size).T          # (4N, N)
    b_ff2 = linear_b(keys[next(ki)], model_size, 4 * model_size).reshape(1, model_size)

    # LayerNorm affine params (learnable; randomized to exercise the affine path).
    g1 = jax.random.uniform(keys[next(ki)], (1, model_size), minval=0.5, maxval=1.5,
                            dtype=jnp.float32)
    beta1 = jax.random.uniform(keys[next(ki)], (1, model_size), minval=-0.5, maxval=0.5,
                               dtype=jnp.float32)
    g2 = jax.random.uniform(keys[next(ki)], (1, model_size), minval=0.5, maxval=1.5,
                            dtype=jnp.float32)
    beta2 = jax.random.uniform(keys[next(ki)], (1, model_size), minval=-0.5, maxval=0.5,
                               dtype=jnp.float32)

    # ---- kernel-side params: bf16 weights, scale folded into Wq, packed vectors ----
    # NOTE: the module scales attention scores by model_size**-0.5 (not head_size**-0.5);
    # we keep that semantics and fold it into the Wq columns host-side (free).
    scale = model_size ** (-0.5)
    w_qkv_kernel = jnp.concatenate([wq_cat * scale, wk_cat, wv_cat],
                                   axis=1).astype(jnp.bfloat16)   # (N, 3N) bf16
    vec_pack = jnp.concatenate(
        [g1, beta1, b_o, g2, beta2, b_ff2,
         jnp.zeros((2, model_size), jnp.float32)], axis=0)        # (8, N) f32

    params = dict(w_qkv=w_qkv_kernel,
                  w_o=w_o.astype(jnp.bfloat16),
                  w_ff1=w_ff1.astype(jnp.bfloat16),
                  w_ff2=w_ff2.astype(jnp.bfloat16),
                  vec_pack=vec_pack,
                  b_ff1=b_ff1)

    out = attention_block(x, params, num_heads)
    out = jax.block_until_ready(out)

    # ---- pure-JAX f32 reference (eval-mode dropout = identity) ----
    def ln_ref(v, g, b):
        mu = v.mean(-1, keepdims=True)
        var = ((v - mu) ** 2).mean(-1, keepdims=True)
        return (v - mu) / jnp.sqrt(var + LN_EPS) * g + b

    w_qkv_ref = jnp.concatenate([wq_cat, wk_cat, wv_cat], axis=1)   # unscaled f32
    xn = ln_ref(x, g1, beta1)
    qkv = xn @ w_qkv_ref
    q, k, v = jnp.split(qkv, 3, axis=-1)
    q = q.reshape(B, L, num_heads, head_size)
    k = k.reshape(B, L, num_heads, head_size)
    v = v.reshape(B, L, num_heads, head_size)
    att = jnp.einsum("blhd,bmhd->bhlm", q, k) * model_size ** (-0.5)
    causal = jnp.tril(jnp.ones((L, L), dtype=bool))
    att = jnp.where(causal, att, -jnp.inf)
    att = jax.nn.softmax(att, axis=-1)
    heads = jnp.einsum("bhlm,bmhd->blhd", att, v).reshape(B, L, model_size)
    x1 = x + heads @ w_o + b_o
    xn2 = ln_ref(x1, g2, beta2)
    ref = x1 + jnp.maximum(xn2 @ w_ff1 + b_ff1, 0.0) @ w_ff2 + b_ff2

    assert out.shape == (B, L, model_size)
    # Tolerance reflects bf16 MXU operands (f32 accumulation) plus the approx (EUP)
    # reciprocal in the softmax denominator.
    err = jnp.max(jnp.abs(out - ref))
    assert jnp.allclose(out, ref, atol=3e-2, rtol=3e-2), f"mismatch vs reference (max abs err {err})"

    print("KERNEL_OK")
</pallas_src>

<mosaic_0001>
module attributes {stable_mosaic.version = 11 : i64} {
  func.func @_attention_block_kernel(%arg0: i32, %arg1: memref<2x8x128xf32, #tpu.memory_space<vmem>>, %arg2: memref<128x384xbf16, #tpu.memory_space<vmem>>, %arg3: memref<128x128xbf16, #tpu.memory_space<vmem>>, %arg4: memref<128x512xbf16, #tpu.memory_space<vmem>>, %arg5: memref<512x128xbf16, #tpu.memory_space<vmem>>, %arg6: memref<8x128xf32, #tpu.memory_space<vmem>>, %arg7: memref<1x512xf32, #tpu.memory_space<vmem>>, %arg8: memref<2x8x128xf32, #tpu.memory_space<vmem>>) attributes {dimension_semantics = [#tpu.dimension_semantics<arbitrary>], iteration_bounds = array<i64: 1>, scalar_prefetch = 0 : i64, scratch_operands = 0 : i64, tpu.core_type = #tpu.core_type<tc>, window_params = [{transform_indices = @transform_0, window_bounds = array<i64: 2, 8, 128>}, {pipeline_mode = #tpu.pipeline_mode<synchronous>, transform_indices = @transform_1, window_bounds = array<i64: 128, 384>}, {pipeline_mode = #tpu.pipeline_mode<synchronous>, transform_indices = @transform_2, window_bounds = array<i64: 128, 128>}, {pipeline_mode = #tpu.pipeline_mode<synchronous>, transform_indices = @transform_3, window_bounds = array<i64: 128, 512>}, {pipeline_mode = #tpu.pipeline_mode<synchronous>, transform_indices = @transform_4, window_bounds = array<i64: 512, 128>}, {pipeline_mode = #tpu.pipeline_mode<synchronous>, transform_indices = @transform_5, window_bounds = array<i64: 8, 128>}, {pipeline_mode = #tpu.pipeline_mode<synchronous>, transform_indices = @transform_6, window_bounds = array<i64: 1, 512>}, {transform_indices = @transform_7, window_bounds = array<i64: 2, 8, 128>}]} {
    %c0 = arith.constant 0 : index
    %c0_0 = arith.constant 0 : index
    %c0_1 = arith.constant 0 : index
    %0 = vector.load %arg1[%c0, %c0_0, %c0_1] : memref<2x8x128xf32, #tpu.memory_space<vmem>>, vector<2x8x128xf32>
    %1 = vector.shape_cast %0 : vector<2x8x128xf32> to vector<16x128xf32>
    %c0_2 = arith.constant 0 : index
    %c0_3 = arith.constant 0 : index
    %2 = vector.load %arg6[%c0_2, %c0_3] : memref<8x128xf32, #tpu.memory_space<vmem>>, vector<1x128xf32>
    %c1 = arith.constant 1 : index
    %c0_4 = arith.constant 0 : index
    %3 = vector.load %arg6[%c1, %c0_4] : memref<8x128xf32, #tpu.memory_space<vmem>>, vector<1x128xf32>
    %c2 = arith.constant 2 : index
    %c0_5 = arith.constant 0 : index
    %4 = vector.load %arg6[%c2, %c0_5] : memref<8x128xf32, #tpu.memory_space<vmem>>, vector<1x128xf32>
    %c3 = arith.constant 3 : index
    %c0_6 = arith.constant 0 : index
    %5 = vector.load %arg6[%c3, %c0_6] : memref<8x128xf32, #tpu.memory_space<vmem>>, vector<1x128xf32>
    %c4 = arith.constant 4 : index
    %c0_7 = arith.constant 0 : index
    %6 = vector.load %arg6[%c4, %c0_7] : memref<8x128xf32, #tpu.memory_space<vmem>>, vector<1x128xf32>
    %c5 = arith.constant 5 : index
    %c0_8 = arith.constant 0 : index
    %7 = vector.load %arg6[%c5, %c0_8] : memref<8x128xf32, #tpu.memory_space<vmem>>, vector<1x128xf32>
    %c0_9 = arith.constant 0 : index
    %c0_10 = arith.constant 0 : index
    %8 = vector.load %arg7[%c0_9, %c0_10] : memref<1x512xf32, #tpu.memory_space<vmem>>, vector<1x512xf32>
    %cst = arith.constant dense<0.000000e+00> : vector<16xf32>
    %9 = vector.multi_reduction <add>, %1, %cst [1] : vector<16x128xf32> to vector<16xf32>
    %10 = vector.shape_cast %9 : vector<16xf32> to vector<16x1xf32>
    %cst_11 = arith.constant 1.280000e+02 : f32
    %11 = vector.broadcast %cst_11 : f32 to vector<16x1xf32>
    %12 = arith.divf %10, %11 : vector<16x1xf32>
    %13 = vector.broadcast %12 : vector<16x1xf32> to vector<16x128xf32>
    %14 = arith.subf %1, %13 : vector<16x128xf32>
    %15 = arith.mulf %14, %14 : vector<16x128xf32>
    %cst_12 = arith.constant dense<0.000000e+00> : vector<16xf32>
    %16 = vector.multi_reduction <add>, %15, %cst_12 [1] : vector<16x128xf32> to vector<16xf32>
    %17 = vector.shape_cast %16 : vector<16xf32> to vector<16x1xf32>
    %cst_13 = arith.constant 1.280000e+02 : f32
    %18 = vector.broadcast %cst_13 : f32 to vector<16x1xf32>
    %19 = arith.divf %17, %18 : vector<16x1xf32>
    %cst_14 = arith.constant 9.99999974E-6 : f32
    %20 = vector.broadcast %cst_14 : f32 to vector<16x1xf32>
    %21 = arith.addf %19, %20 : vector<16x1xf32>
    %22 = math.rsqrt %21 : vector<16x1xf32>
    %23 = vector.broadcast %22 : vector<16x1xf32> to vector<16x128xf32>
    %24 = arith.mulf %14, %23 : vector<16x128xf32>
    %25 = vector.broadcast %2 : vector<1x128xf32> to vector<16x128xf32>
    %26 = arith.mulf %24, %25 : vector<16x128xf32>
    %27 = vector.broadcast %3 : vector<1x128xf32> to vector<16x128xf32>
    %28 = arith.addf %26, %27 : vector<16x128xf32>
    %29 = arith.truncf %28 : vector<16x128xf32> to vector<16x128xbf16>
    %c0_15 = arith.constant 0 : index
    %c0_16 = arith.constant 0 : index
    %30 = vector.load %arg2[%c0_15, %c0_16] : memref<128x384xbf16, #tpu.memory_space<vmem>>, vector<128x384xbf16>
    %cst_17 = arith.constant dense<0.000000e+00> : vector<16x384xf32>
    %31 = tpu.matmul %29, %30, %cst_17 {dimension_numbers = #tpu.dot_dimension_numbers<[1], [0], [0], [1], [0, 0, 1, 1], [], []>} : vector<16x128xbf16>, vector<128x384xbf16>, vector<16x384xf32> -> vector<16x384xf32>
    %32 = vector.extract_strided_slice %31 {offsets = [0, 0], sizes = [16, 128], strides = [1, 1]} : vector<16x384xf32> to vector<16x128xf32>
    %33 = vector.extract_strided_slice %31 {offsets = [0, 128], sizes = [16, 128], strides = [1, 1]} : vector<16x384xf32> to vector<16x128xf32>
    %34 = vector.extract_strided_slice %31 {offsets = [0, 256], sizes = [16, 128], strides = [1, 1]} : vector<16x384xf32> to vector<16x128xf32>
    %35 = tpu.iota {dimensions = array<i32: 0>} : vector<8x8xi32>
    %36 = tpu.iota {dimensions = array<i32: 1>} : vector<8x8xi32>
    %37 = arith.cmpi sge, %35, %36 : vector<8x8xi32>
    %cst_18 = arith.constant 0.000000e+00 : f32
    %cst_19 = arith.constant -1.000000e+30 : f32
    %38 = vector.broadcast %cst_18 : f32 to vector<8x8xf32>
    %39 = vector.broadcast %cst_19 : f32 to vector<8x8xf32>
    %40 = arith.select %37, %38, %39 : vector<8x8xi1>, vector<8x8xf32>
    %41 = vector.extract_strided_slice %32 {offsets = [0, 0], sizes = [8, 128], strides = [1, 1]} : vector<16x128xf32> to vector<8x128xf32>
    %42 = arith.truncf %41 : vector<8x128xf32> to vector<8x128xbf16>
    %43 = vector.extract_strided_slice %33 {offsets = [0, 0], sizes = [8, 128], strides = [1, 1]} : vector<16x128xf32> to vector<8x128xf32>
    %44 = arith.truncf %43 : vector<8x128xf32> to vector<8x128xbf16>
    %45 = vector.extract_strided_slice %34 {offsets = [0, 0], sizes = [8, 128], strides = [1, 1]} : vector<16x128xf32> to vector<8x128xf32>
    %46 = arith.truncf %45 : vector<8x128xf32> to vector<8x128xbf16>
    %cst_20 = arith.constant 0.000000e+00 : f32
    %47 = vector.broadcast %cst_20 : f32 to vector<8x128xf32>
    %48 = vector.extract_strided_slice %42 {offsets = [0, 0], sizes = [8, 32], strides = [1, 1]} : vector<8x128xbf16> to vector<8x32xbf16>
    %49 = vector.extract_strided_slice %44 {offsets = [0, 0], sizes = [8, 32], strides = [1, 1]} : vector<8x128xbf16> to vector<8x32xbf16>
    %cst_21 = arith.constant dense<0.000000e+00> : vector<8x8xf32>
    %50 = tpu.matmul %48, %49, %cst_21 {dimension_numbers = #tpu.dot_dimension_numbers<[1], [1], [0], [0], [0, 0, 1, 0], [], []>} : vector<8x32xbf16>, vector<8x32xbf16>, vector<8x8xf32> -> vector<8x8xf32>
    %51 = arith.addf %50, %40 : vector<8x8xf32>
    %cst_22 = arith.constant dense<0xFF800000> : vector<8xf32>
    %52 = vector.multi_reduction <maximumf>, %51, %cst_22 [1] : vector<8x8xf32> to vector<8xf32>
    %53 = vector.shape_cast %52 : vector<8xf32> to vector<8x1xf32>
    %54 = vector.broadcast %53 : vector<8x1xf32> to vector<8x8xf32>
    %55 = arith.subf %51, %54 : vector<8x8xf32>
    %56 = math.exp %55 : vector<8x8xf32>
    %cst_23 = arith.constant dense<0.000000e+00> : vector<8xf32>
    %57 = vector.multi_reduction <add>, %56, %cst_23 [1] : vector<8x8xf32> to vector<8xf32>
    %58 = vector.shape_cast %57 : vector<8xf32> to vector<8x1xf32>
    %59 = tpu.reciprocal %58 {approx = true} : vector<8x1xf32> -> vector<8x1xf32>
    %60 = vector.broadcast %59 : vector<8x1xf32> to vector<8x8xf32>
    %61 = arith.mulf %56, %60 : vector<8x8xf32>
    %62 = arith.truncf %61 : vector<8x8xf32> to vector<8x8xbf16>
    %63 = vector.extract_strided_slice %46 {offsets = [0, 0], sizes = [8, 32], strides = [1, 1]} : vector<8x128xbf16> to vector<8x32xbf16>
    %cst_24 = arith.constant dense<0.000000e+00> : vector<8x32xf32>
    %64 = tpu.matmul %62, %63, %cst_24 {dimension_numbers = #tpu.dot_dimension_numbers<[1], [0], [0], [1], [0, 0, 1, 1], [], []>} : vector<8x8xbf16>, vector<8x32xbf16>, vector<8x32xf32> -> vector<8x32xf32>
    %65 = arith.truncf %64 : vector<8x32xf32> to vector<8x32xbf16>
    %c0_25 = arith.constant 0 : index
    %c0_26 = arith.constant 0 : index
    %66 = vector.load %arg3[%c0_25, %c0_26] : memref<128x128xbf16, #tpu.memory_space<vmem>>, vector<32x128xbf16>
    %cst_27 = arith.constant dense<0.000000e+00> : vector<8x128xf32>
    %67 = tpu.matmul %65, %66, %cst_27 {dimension_numbers = #tpu.dot_dimension_numbers<[1], [0], [0], [1], [0, 0, 1, 1], [], []>} : vector<8x32xbf16>, vector<32x128xbf16>, vector<8x128xf32> -> vector<8x128xf32>
    %68 = arith.addf %47, %67 : vector<8x128xf32>
    %69 = vector.extract_strided_slice %42 {offsets = [0, 32], sizes = [8, 32], strides = [1, 1]} : vector<8x128xbf16> to vector<8x32xbf16>
    %70 = vector.extract_strided_slice %44 {offsets = [0, 32], sizes = [8, 32], strides = [1, 1]} : vector<8x128xbf16> to vector<8x32xbf16>
    %cst_28 = arith.constant dense<0.000000e+00> : vector<8x8xf32>
    %71 = tpu.matmul %69, %70, %cst_28 {dimension_numbers = #tpu.dot_dimension_numbers<[1], [1], [0], [0], [0, 0, 1, 0], [], []>} : vector<8x32xbf16>, vector<8x32xbf16>, vector<8x8xf32> -> vector<8x8xf32>
    %72 = arith.addf %71, %40 : vector<8x8xf32>
    %cst_29 = arith.constant dense<0xFF800000> : vector<8xf32>
    %73 = vector.multi_reduction <maximumf>, %72, %cst_29 [1] : vector<8x8xf32> to vector<8xf32>
    %74 = vector.shape_cast %73 : vector<8xf32> to vector<8x1xf32>
    %75 = vector.broadcast %74 : vector<8x1xf32> to vector<8x8xf32>
    %76 = arith.subf %72, %75 : vector<8x8xf32>
    %77 = math.exp %76 : vector<8x8xf32>
    %cst_30 = arith.constant dense<0.000000e+00> : vector<8xf32>
    %78 = vector.multi_reduction <add>, %77, %cst_30 [1] : vector<8x8xf32> to vector<8xf32>
    %79 = vector.shape_cast %78 : vector<8xf32> to vector<8x1xf32>
    %80 = tpu.reciprocal %79 {approx = true} : vector<8x1xf32> -> vector<8x1xf32>
    %81 = vector.broadcast %80 : vector<8x1xf32> to vector<8x8xf32>
    %82 = arith.mulf %77, %81 : vector<8x8xf32>
    %83 = arith.truncf %82 : vector<8x8xf32> to vector<8x8xbf16>
    %84 = vector.extract_strided_slice %46 {offsets = [0, 32], sizes = [8, 32], strides = [1, 1]} : vector<8x128xbf16> to vector<8x32xbf16>
    %cst_31 = arith.constant dense<0.000000e+00> : vector<8x32xf32>
    %85 = tpu.matmul %83, %84, %cst_31 {dimension_numbers = #tpu.dot_dimension_numbers<[1], [0], [0], [1], [0, 0, 1, 1], [], []>} : vector<8x8xbf16>, vector<8x32xbf16>, vector<8x32xf32> -> vector<8x32xf32>
    %86 = arith.truncf %85 : vector<8x32xf32> to vector<8x32xbf16>
    %c32 = arith.constant 32 : index
    %c0_32 = arith.constant 0 : index
    %87 = vector.load %arg3[%c32, %c0_32] : memref<128x128xbf16, #tpu.memory_space<vmem>>, vector<32x128xbf16>
    %cst_33 = arith.constant dense<0.000000e+00> : vector<8x128xf32>
    %88 = tpu.matmul %86, %87, %cst_33 {dimension_numbers = #tpu.dot_dimension_numbers<[1], [0], [0], [1], [0, 0, 1, 1], [], []>} : vector<8x32xbf16>, vector<32x128xbf16>, vector<8x128xf32> -> vector<8x128xf32>
    %89 = arith.addf %68, %88 : vector<8x128xf32>
    %90 = vector.extract_strided_slice %42 {offsets = [0, 64], sizes = [8, 32], strides = [1, 1]} : vector<8x128xbf16> to vector<8x32xbf16>
    %91 = vector.extract_strided_slice %44 {offsets = [0, 64], sizes = [8, 32], strides = [1, 1]} : vector<8x128xbf16> to vector<8x32xbf16>
    %cst_34 = arith.constant dense<0.000000e+00> : vector<8x8xf32>
    %92 = tpu.matmul %90, %91, %cst_34 {dimension_numbers = #tpu.dot_dimension_numbers<[1], [1], [0], [0], [0, 0, 1, 0], [], []>} : vector<8x32xbf16>, vector<8x32xbf16>, vector<8x8xf32> -> vector<8x8xf32>
    %93 = arith.addf %92, %40 : vector<8x8xf32>
    %cst_35 = arith.constant dense<0xFF800000> : vector<8xf32>
    %94 = vector.multi_reduction <maximumf>, %93, %cst_35 [1] : vector<8x8xf32> to vector<8xf32>
    %95 = vector.shape_cast %94 : vector<8xf32> to vector<8x1xf32>
    %96 = vector.broadcast %95 : vector<8x1xf32> to vector<8x8xf32>
    %97 = arith.subf %93, %96 : vector<8x8xf32>
    %98 = math.exp %97 : vector<8x8xf32>
    %cst_36 = arith.constant dense<0.000000e+00> : vector<8xf32>
    %99 = vector.multi_reduction <add>, %98, %cst_36 [1] : vector<8x8xf32> to vector<8xf32>
    %100 = vector.shape_cast %99 : vector<8xf32> to vector<8x1xf32>
    %101 = tpu.reciprocal %100 {approx = true} : vector<8x1xf32> -> vector<8x1xf32>
    %102 = vector.broadcast %101 : vector<8x1xf32> to vector<8x8xf32>
    %103 = arith.mulf %98, %102 : vector<8x8xf32>
    %104 = arith.truncf %103 : vector<8x8xf32> to vector<8x8xbf16>
    %105 = vector.extract_strided_slice %46 {offsets = [0, 64], sizes = [8, 32], strides = [1, 1]} : vector<8x128xbf16> to vector<8x32xbf16>
    %cst_37 = arith.constant dense<0.000000e+00> : vector<8x32xf32>
    %106 = tpu.matmul %104, %105, %cst_37 {dimension_numbers = #tpu.dot_dimension_numbers<[1], [0], [0], [1], [0, 0, 1, 1], [], []>} : vector<8x8xbf16>, vector<8x32xbf16>, vector<8x32xf32> -> vector<8x32xf32>
    %107 = arith.truncf %106 : vector<8x32xf32> to vector<8x32xbf16>
    %c64 = arith.constant 64 : index
    %c0_38 = arith.constant 0 : index
    %108 = vector.load %arg3[%c64, %c0_38] : memref<128x128xbf16, #tpu.memory_space<vmem>>, vector<32x128xbf16>
    %cst_39 = arith.constant dense<0.000000e+00> : vector<8x128xf32>
    %109 = tpu.matmul %107, %108, %cst_39 {dimension_numbers = #tpu.dot_dimension_numbers<[1], [0], [0], [1], [0, 0, 1, 1], [], []>} : vector<8x32xbf16>, vector<32x128xbf16>, vector<8x128xf32> -> vector<8x128xf32>
    %110 = arith.addf %89, %109 : vector<8x128xf32>
    %111 = vector.extract_strided_slice %42 {offsets = [0, 96], sizes = [8, 32], strides = [1, 1]} : vector<8x128xbf16> to vector<8x32xbf16>
    %112 = vector.extract_strided_slice %44 {offsets = [0, 96], sizes = [8, 32], strides = [1, 1]} : vector<8x128xbf16> to vector<8x32xbf16>
    %cst_40 = arith.constant dense<0.000000e+00> : vector<8x8xf32>
    %113 = tpu.matmul %111, %112, %cst_40 {dimension_numbers = #tpu.dot_dimension_numbers<[1], [1], [0], [0], [0, 0, 1, 0], [], []>} : vector<8x32xbf16>, vector<8x32xbf16>, vector<8x8xf32> -> vector<8x8xf32>
    %114 = arith.addf %113, %40 : vector<8x8xf32>
    %cst_41 = arith.constant dense<0xFF800000> : vector<8xf32>
    %115 = vector.multi_reduction <maximumf>, %114, %cst_41 [1] : vector<8x8xf32> to vector<8xf32>
    %116 = vector.shape_cast %115 : vector<8xf32> to vector<8x1xf32>
    %117 = vector.broadcast %116 : vector<8x1xf32> to vector<8x8xf32>
    %118 = arith.subf %114, %117 : vector<8x8xf32>
    %119 = math.exp %118 : vector<8x8xf32>
    %cst_42 = arith.constant dense<0.000000e+00> : vector<8xf32>
    %120 = vector.multi_reduction <add>, %119, %cst_42 [1] : vector<8x8xf32> to vector<8xf32>
    %121 = vector.shape_cast %120 : vector<8xf32> to vector<8x1xf32>
    %122 = tpu.reciprocal %121 {approx = true} : vector<8x1xf32> -> vector<8x1xf32>
    %123 = vector.broadcast %122 : vector<8x1xf32> to vector<8x8xf32>
    %124 = arith.mulf %119, %123 : vector<8x8xf32>
    %125 = arith.truncf %124 : vector<8x8xf32> to vector<8x8xbf16>
    %126 = vector.extract_strided_slice %46 {offsets = [0, 96], sizes = [8, 32], strides = [1, 1]} : vector<8x128xbf16> to vector<8x32xbf16>
    %cst_43 = arith.constant dense<0.000000e+00> : vector<8x32xf32>
    %127 = tpu.matmul %125, %126, %cst_43 {dimension_numbers = #tpu.dot_dimension_numbers<[1], [0], [0], [1], [0, 0, 1, 1], [], []>} : vector<8x8xbf16>, vector<8x32xbf16>, vector<8x32xf32> -> vector<8x32xf32>
    %128 = arith.truncf %127 : vector<8x32xf32> to vector<8x32xbf16>
    %c96 = arith.constant 96 : index
    %c0_44 = arith.constant 0 : index
    %129 = vector.load %arg3[%c96, %c0_44] : memref<128x128xbf16, #tpu.memory_space<vmem>>, vector<32x128xbf16>
    %cst_45 = arith.constant dense<0.000000e+00> : vector<8x128xf32>
    %130 = tpu.matmul %128, %129, %cst_45 {dimension_numbers = #tpu.dot_dimension_numbers<[1], [0], [0], [1], [0, 0, 1, 1], [], []>} : vector<8x32xbf16>, vector<32x128xbf16>, vector<8x128xf32> -> vector<8x128xf32>
    %131 = arith.addf %110, %130 : vector<8x128xf32>
    %132 = vector.extract_strided_slice %32 {offsets = [8, 0], sizes = [8, 128], strides = [1, 1]} : vector<16x128xf32> to vector<8x128xf32>
    %133 = arith.truncf %132 : vector<8x128xf32> to vector<8x128xbf16>
    %134 = vector.extract_strided_slice %33 {offsets = [8, 0], sizes = [8, 128], strides = [1, 1]} : vector<16x128xf32> to vector<8x128xf32>
    %135 = arith.truncf %134 : vector<8x128xf32> to vector<8x128xbf16>
    %136 = vector.extract_strided_slice %34 {offsets = [8, 0], sizes = [8, 128], strides = [1, 1]} : vector<16x128xf32> to vector<8x128xf32>
    %137 = arith.truncf %136 : vector<8x128xf32> to vector<8x128xbf16>
    %cst_46 = arith.constant 0.000000e+00 : f32
    %138 = vector.broadcast %cst_46 : f32 to vector<8x128xf32>
    %139 = vector.extract_strided_slice %133 {offsets = [0, 0], sizes = [8, 32], strides = [1, 1]} : vector<8x128xbf16> to vector<8x32xbf16>
    %140 = vector.extract_strided_slice %135 {offsets = [0, 0], sizes = [8, 32], strides = [1, 1]} : vector<8x128xbf16> to vector<8x32xbf16>
    %cst_47 = arith.constant dense<0.000000e+00> : vector<8x8xf32>
    %141 = tpu.matmul %139, %140, %cst_47 {dimension_numbers = #tpu.dot_dimension_numbers<[1], [1], [0], [0], [0, 0, 1, 0], [], []>} : vector<8x32xbf16>, vector<8x32xbf16>, vector<8x8xf32> -> vector<8x8xf32>
    %142 = arith.addf %141, %40 : vector<8x8xf32>
    %cst_48 = arith.constant dense<0xFF800000> : vector<8xf32>
    %143 = vector.multi_reduction <maximumf>, %142, %cst_48 [1] : vector<8x8xf32> to vector<8xf32>
    %144 = vector.shape_cast %143 : vector<8xf32> to vector<8x1xf32>
    %145 = vector.broadcast %144 : vector<8x1xf32> to vector<8x8xf32>
    %146 = arith.subf %142, %145 : vector<8x8xf32>
    %147 = math.exp %146 : vector<8x8xf32>
    %cst_49 = arith.constant dense<0.000000e+00> : vector<8xf32>
    %148 = vector.multi_reduction <add>, %147, %cst_49 [1] : vector<8x8xf32> to vector<8xf32>
    %149 = vector.shape_cast %148 : vector<8xf32> to vector<8x1xf32>
    %150 = tpu.reciprocal %149 {approx = true} : vector<8x1xf32> -> vector<8x1xf32>
    %151 = vector.broadcast %150 : vector<8x1xf32> to vector<8x8xf32>
    %152 = arith.mulf %147, %151 : vector<8x8xf32>
    %153 = arith.truncf %152 : vector<8x8xf32> to vector<8x8xbf16>
    %154 = vector.extract_strided_slice %137 {offsets = [0, 0], sizes = [8, 32], strides = [1, 1]} : vector<8x128xbf16> to vector<8x32xbf16>
    %cst_50 = arith.constant dense<0.000000e+00> : vector<8x32xf32>
    %155 = tpu.matmul %153, %154, %cst_50 {dimension_numbers = #tpu.dot_dimension_numbers<[1], [0], [0], [1], [0, 0, 1, 1], [], []>} : vector<8x8xbf16>, vector<8x32xbf16>, vector<8x32xf32> -> vector<8x32xf32>
    %156 = arith.truncf %155 : vector<8x32xf32> to vector<8x32xbf16>
    %c0_51 = arith.constant 0 : index
    %c0_52 = arith.constant 0 : index
    %157 = vector.load %arg3[%c0_51, %c0_52] : memref<128x128xbf16, #tpu.memory_space<vmem>>, vector<32x128xbf16>
    %cst_53 = arith.constant dense<0.000000e+00> : vector<8x128xf32>
    %158 = tpu.matmul %156, %157, %cst_53 {dimension_numbers = #tpu.dot_dimension_numbers<[1], [0], [0], [1], [0, 0, 1, 1], [], []>} : vector<8x32xbf16>, vector<32x128xbf16>, vector<8x128xf32> -> vector<8x128xf32>
    %159 = arith.addf %138, %158 : vector<8x128xf32>
    %160 = vector.extract_strided_slice %133 {offsets = [0, 32], sizes = [8, 32], strides = [1, 1]} : vector<8x128xbf16> to vector<8x32xbf16>
    %161 = vector.extract_strided_slice %135 {offsets = [0, 32], sizes = [8, 32], strides = [1, 1]} : vector<8x128xbf16> to vector<8x32xbf16>
    %cst_54 = arith.constant dense<0.000000e+00> : vector<8x8xf32>
    %162 = tpu.matmul %160, %161, %cst_54 {dimension_numbers = #tpu.dot_dimension_numbers<[1], [1], [0], [0], [0, 0, 1, 0], [], []>} : vector<8x32xbf16>, vector<8x32xbf16>, vector<8x8xf32> -> vector<8x8xf32>
    %163 = arith.addf %162, %40 : vector<8x8xf32>
    %cst_55 = arith.constant dense<0xFF800000> : vector<8xf32>
    %164 = vector.multi_reduction <maximumf>, %163, %cst_55 [1] : vector<8x8xf32> to vector<8xf32>
    %165 = vector.shape_cast %164 : vector<8xf32> to vector<8x1xf32>
    %166 = vector.broadcast %165 : vector<8x1xf32> to vector<8x8xf32>
    %167 = arith.subf %163, %166 : vector<8x8xf32>
    %168 = math.exp %167 : vector<8x8xf32>
    %cst_56 = arith.constant dense<0.000000e+00> : vector<8xf32>
    %169 = vector.multi_reduction <add>, %168, %cst_56 [1] : vector<8x8xf32> to vector<8xf32>
    %170 = vector.shape_cast %169 : vector<8xf32> to vector<8x1xf32>
    %171 = tpu.reciprocal %170 {approx = true} : vector<8x1xf32> -> vector<8x1xf32>
    %172 = vector.broadcast %171 : vector<8x1xf32> to vector<8x8xf32>
    %173 = arith.mulf %168, %172 : vector<8x8xf32>
    %174 = arith.truncf %173 : vector<8x8xf32> to vector<8x8xbf16>
    %175 = vector.extract_strided_slice %137 {offsets = [0, 32], sizes = [8, 32], strides = [1, 1]} : vector<8x128xbf16> to vector<8x32xbf16>
    %cst_57 = arith.constant dense<0.000000e+00> : vector<8x32xf32>
    %176 = tpu.matmul %174, %175, %cst_57 {dimension_numbers = #tpu.dot_dimension_numbers<[1], [0], [0], [1], [0, 0, 1, 1], [], []>} : vector<8x8xbf16>, vector<8x32xbf16>, vector<8x32xf32> -> vector<8x32xf32>
    %177 = arith.truncf %176 : vector<8x32xf32> to vector<8x32xbf16>
    %c32_58 = arith.constant 32 : index
    %c0_59 = arith.constant 0 : index
    %178 = vector.load %arg3[%c32_58, %c0_59] : memref<128x128xbf16, #tpu.memory_space<vmem>>, vector<32x128xbf16>
    %cst_60 = arith.constant dense<0.000000e+00> : vector<8x128xf32>
    %179 = tpu.matmul %177, %178, %cst_60 {dimension_numbers = #tpu.dot_dimension_numbers<[1], [0], [0], [1], [0, 0, 1, 1], [], []>} : vector<8x32xbf16>, vector<32x128xbf16>, vector<8x128xf32> -> vector<8x128xf32>
    %180 = arith.addf %159, %179 : vector<8x128xf32>
    %181 = vector.extract_strided_slice %133 {offsets = [0, 64], sizes = [8, 32], strides = [1, 1]} : vector<8x128xbf16> to vector<8x32xbf16>
    %182 = vector.extract_strided_slice %135 {offsets = [0, 64], sizes = [8, 32], strides = [1, 1]} : vector<8x128xbf16> to vector<8x32xbf16>
    %cst_61 = arith.constant dense<0.000000e+00> : vector<8x8xf32>
    %183 = tpu.matmul %181, %182, %cst_61 {dimension_numbers = #tpu.dot_dimension_numbers<[1], [1], [0], [0], [0, 0, 1, 0], [], []>} : vector<8x32xbf16>, vector<8x32xbf16>, vector<8x8xf32> -> vector<8x8xf32>
    %184 = arith.addf %183, %40 : vector<8x8xf32>
    %cst_62 = arith.constant dense<0xFF800000> : vector<8xf32>
    %185 = vector.multi_reduction <maximumf>, %184, %cst_62 [1] : vector<8x8xf32> to vector<8xf32>
    %186 = vector.shape_cast %185 : vector<8xf32> to vector<8x1xf32>
    %187 = vector.broadcast %186 : vector<8x1xf32> to vector<8x8xf32>
    %188 = arith.subf %184, %187 : vector<8x8xf32>
    %189 = math.exp %188 : vector<8x8xf32>
    %cst_63 = arith.constant dense<0.000000e+00> : vector<8xf32>
    %190 = vector.multi_reduction <add>, %189, %cst_63 [1] : vector<8x8xf32> to vector<8xf32>
    %191 = vector.shape_cast %190 : vector<8xf32> to vector<8x1xf32>
    %192 = tpu.reciprocal %191 {approx = true} : vector<8x1xf32> -> vector<8x1xf32>
    %193 = vector.broadcast %192 : vector<8x1xf32> to vector<8x8xf32>
    %194 = arith.mulf %189, %193 : vector<8x8xf32>
    %195 = arith.truncf %194 : vector<8x8xf32> to vector<8x8xbf16>
    %196 = vector.extract_strided_slice %137 {offsets = [0, 64], sizes = [8, 32], strides = [1, 1]} : vector<8x128xbf16> to vector<8x32xbf16>
    %cst_64 = arith.constant dense<0.000000e+00> : vector<8x32xf32>
    %197 = tpu.matmul %195, %196, %cst_64 {dimension_numbers = #tpu.dot_dimension_numbers<[1], [0], [0], [1], [0, 0, 1, 1], [], []>} : vector<8x8xbf16>, vector<8x32xbf16>, vector<8x32xf32> -> vector<8x32xf32>
    %198 = arith.truncf %197 : vector<8x32xf32> to vector<8x32xbf16>
    %c64_65 = arith.constant 64 : index
    %c0_66 = arith.constant 0 : index
    %199 = vector.load %arg3[%c64_65, %c0_66] : memref<128x128xbf16, #tpu.memory_space<vmem>>, vector<32x128xbf16>
    %cst_67 = arith.constant dense<0.000000e+00> : vector<8x128xf32>
    %200 = tpu.matmul %198, %199, %cst_67 {dimension_numbers = #tpu.dot_dimension_numbers<[1], [0], [0], [1], [0, 0, 1, 1], [], []>} : vector<8x32xbf16>, vector<32x128xbf16>, vector<8x128xf32> -> vector<8x128xf32>
    %201 = arith.addf %180, %200 : vector<8x128xf32>
    %202 = vector.extract_strided_slice %133 {offsets = [0, 96], sizes = [8, 32], strides = [1, 1]} : vector<8x128xbf16> to vector<8x32xbf16>
    %203 = vector.extract_strided_slice %135 {offsets = [0, 96], sizes = [8, 32], strides = [1, 1]} : vector<8x128xbf16> to vector<8x32xbf16>
    %cst_68 = arith.constant dense<0.000000e+00> : vector<8x8xf32>
    %204 = tpu.matmul %202, %203, %cst_68 {dimension_numbers = #tpu.dot_dimension_numbers<[1], [1], [0], [0], [0, 0, 1, 0], [], []>} : vector<8x32xbf16>, vector<8x32xbf16>, vector<8x8xf32> -> vector<8x8xf32>
    %205 = arith.addf %204, %40 : vector<8x8xf32>
    %cst_69 = arith.constant dense<0xFF800000> : vector<8xf32>
    %206 = vector.multi_reduction <maximumf>, %205, %cst_69 [1] : vector<8x8xf32> to vector<8xf32>
    %207 = vector.shape_cast %206 : vector<8xf32> to vector<8x1xf32>
    %208 = vector.broadcast %207 : vector<8x1xf32> to vector<8x8xf32>
    %209 = arith.subf %205, %208 : vector<8x8xf32>
    %210 = math.exp %209 : vector<8x8xf32>
    %cst_70 = arith.constant dense<0.000000e+00> : vector<8xf32>
    %211 = vector.multi_reduction <add>, %210, %cst_70 [1] : vector<8x8xf32> to vector<8xf32>
    %212 = vector.shape_cast %211 : vector<8xf32> to vector<8x1xf32>
    %213 = tpu.reciprocal %212 {approx = true} : vector<8x1xf32> -> vector<8x1xf32>
    %214 = vector.broadcast %213 : vector<8x1xf32> to vector<8x8xf32>
    %215 = arith.mulf %210, %214 : vector<8x8xf32>
    %216 = arith.truncf %215 : vector<8x8xf32> to vector<8x8xbf16>
    %217 = vector.extract_strided_slice %137 {offsets = [0, 96], sizes = [8, 32], strides = [1, 1]} : vector<8x128xbf16> to vector<8x32xbf16>
    %cst_71 = arith.constant dense<0.000000e+00> : vector<8x32xf32>
    %218 = tpu.matmul %216, %217, %cst_71 {dimension_numbers = #tpu.dot_dimension_numbers<[1], [0], [0], [1], [0, 0, 1, 1], [], []>} : vector<8x8xbf16>, vector<8x32xbf16>, vector<8x32xf32> -> vector<8x32xf32>
    %219 = arith.truncf %218 : vector<8x32xf32> to vector<8x32xbf16>
    %c96_72 = arith.constant 96 : index
    %c0_73 = arith.constant 0 : index
    %220 = vector.load %arg3[%c96_72, %c0_73] : memref<128x128xbf16, #tpu.memory_space<vmem>>, vector<32x128xbf16>
    %cst_74 = arith.constant dense<0.000000e+00> : vector<8x128xf32>
    %221 = tpu.matmul %219, %220, %cst_74 {dimension_numbers = #tpu.dot_dimension_numbers<[1], [0], [0], [1], [0, 0, 1, 1], [], []>} : vector<8x32xbf16>, vector<32x128xbf16>, vector<8x128xf32> -> vector<8x128xf32>
    %222 = arith.addf %201, %221 : vector<8x128xf32>
    %223 = tpu.concatenate %131, %222 in 0 : vector<8x128xf32>, vector<8x128xf32> -> vector<16x128xf32>
    %224 = vector.broadcast %4 : vector<1x128xf32> to vector<16x128xf32>
    %225 = arith.addf %223, %224 : vector<16x128xf32>
    %226 = arith.addf %1, %225 : vector<16x128xf32>
    %cst_75 = arith.constant dense<0.000000e+00> : vector<16xf32>
    %227 = vector.multi_reduction <add>, %226, %cst_75 [1] : vector<16x128xf32> to vector<16xf32>
    %228 = vector.shape_cast %227 : vector<16xf32> to vector<16x1xf32>
    %cst_76 = arith.constant 1.280000e+02 : f32
    %229 = vector.broadcast %cst_76 : f32 to vector<16x1xf32>
    %230 = arith.divf %228, %229 : vector<16x1xf32>
    %231 = vector.broadcast %230 : vector<16x1xf32> to vector<16x128xf32>
    %232 = arith.subf %226, %231 : vector<16x128xf32>
    %233 = arith.mulf %232, %232 : vector<16x128xf32>
    %cst_77 = arith.constant dense<0.000000e+00> : vector<16xf32>
    %234 = vector.multi_reduction <add>, %233, %cst_77 [1] : vector<16x128xf32> to vector<16xf32>
    %235 = vector.shape_cast %234 : vector<16xf32> to vector<16x1xf32>
    %cst_78 = arith.constant 1.280000e+02 : f32
    %236 = vector.broadcast %cst_78 : f32 to vector<16x1xf32>
    %237 = arith.divf %235, %236 : vector<16x1xf32>
    %cst_79 = arith.constant 9.99999974E-6 : f32
    %238 = vector.broadcast %cst_79 : f32 to vector<16x1xf32>
    %239 = arith.addf %237, %238 : vector<16x1xf32>
    %240 = math.rsqrt %239 : vector<16x1xf32>
    %241 = vector.broadcast %240 : vector<16x1xf32> to vector<16x128xf32>
    %242 = arith.mulf %232, %241 : vector<16x128xf32>
    %243 = vector.broadcast %5 : vector<1x128xf32> to vector<16x128xf32>
    %244 = arith.mulf %242, %243 : vector<16x128xf32>
    %245 = vector.broadcast %6 : vector<1x128xf32> to vector<16x128xf32>
    %246 = arith.addf %244, %245 : vector<16x128xf32>
    %247 = arith.truncf %246 : vector<16x128xf32> to vector<16x128xbf16>
    %c0_80 = arith.constant 0 : index
    %c0_81 = arith.constant 0 : index
    %248 = vector.load %arg4[%c0_80, %c0_81] : memref<128x512xbf16, #tpu.memory_space<vmem>>, vector<128x512xbf16>
    %cst_82 = arith.constant dense<0.000000e+00> : vector<16x512xf32>
    %249 = tpu.matmul %247, %248, %cst_82 {dimension_numbers = #tpu.dot_dimension_numbers<[1], [0], [0], [1], [0, 0, 1, 1], [], []>} : vector<16x128xbf16>, vector<128x512xbf16>, vector<16x512xf32> -> vector<16x512xf32>
    %250 = vector.broadcast %8 : vector<1x512xf32> to vector<16x512xf32>
    %251 = arith.addf %249, %250 : vector<16x512xf32>
    %cst_83 = arith.constant 0.000000e+00 : f32
    %252 = vector.broadcast %cst_83 : f32 to vector<16x512xf32>
    %253 = arith.maximumf %251, %252 : vector<16x512xf32>
    %254 = arith.truncf %253 : vector<16x512xf32> to vector<16x512xbf16>
    %c0_84 = arith.constant 0 : index
    %c0_85 = arith.constant 0 : index
    %255 = vector.load %arg5[%c0_84, %c0_85] : memref<512x128xbf16, #tpu.memory_space<vmem>>, vector<512x128xbf16>
    %cst_86 = arith.constant dense<0.000000e+00> : vector<16x128xf32>
    %256 = tpu.matmul %254, %255, %cst_86 {dimension_numbers = #tpu.dot_dimension_numbers<[1], [0], [0], [1], [0, 0, 1, 1], [], []>} : vector<16x512xbf16>, vector<512x128xbf16>, vector<16x128xf32> -> vector<16x128xf32>
    %257 = vector.broadcast %7 : vector<1x128xf32> to vector<16x128xf32>
    %258 = arith.addf %256, %257 : vector<16x128xf32>
    %259 = arith.addf %226, %258 : vector<16x128xf32>
    %260 = vector.shape_cast %259 : vector<16x128xf32> to vector<2x8x128xf32>
    %c0_87 = arith.constant 0 : index
    %c0_88 = arith.constant 0 : index
    %c0_89 = arith.constant 0 : index
    %261 = vector.load %arg8[%c0_87, %c0_88, %c0_89] : memref<2x8x128xf32, #tpu.memory_space<vmem>>, vector<2x8x128xf32>
    tpu.vector_store %arg8[%c0_87, %c0_88, %c0_89], %260 {strides = array<i32>} : memref<2x8x128xf32, #tpu.memory_space<vmem>>, vector<2x8x128xf32>,
    return
  }
  func.func @transform_0(%arg0: i32) -> (i32, i32, i32) {
    %c0_i32 = arith.constant 0 : i32
    %c0_i32_0 = arith.constant 0 : i32
    %c0_i32_1 = arith.constant 0 : i32
    return %arg0, %c0_i32, %c0_i32_0 : i32, i32, i32
  }
  func.func @transform_1(%arg0: i32) -> (i32, i32) {
    %c0_i32 = arith.constant 0 : i32
    %c0_i32_0 = arith.constant 0 : i32
    %c0_i32_1 = arith.constant 0 : i32
    return %c0_i32, %c0_i32_0 : i32, i32
  }
  func.func @transform_2(%arg0: i32) -> (i32, i32) {
    %c0_i32 = arith.constant 0 : i32
    %c0_i32_0 = arith.constant 0 : i32
    %c0_i32_1 = arith.constant 0 : i32
    return %c0_i32, %c0_i32_0 : i32, i32
  }
  func.func @transform_3(%arg0: i32) -> (i32, i32) {
    %c0_i32 = arith.constant 0 : i32
    %c0_i32_0 = arith.constant 0 : i32
    %c0_i32_1 = arith.constant 0 : i32
    return %c0_i32, %c0_i32_0 : i32, i32
  }
  func.func @transform_4(%arg0: i32) -> (i32, i32) {
    %c0_i32 = arith.constant 0 : i32
    %c0_i32_0 = arith.constant 0 : i32
    %c0_i32_1 = arith.constant 0 : i32
    return %c0_i32, %c0_i32_0 : i32, i32
  }
  func.func @transform_5(%arg0: i32) -> (i32, i32) {
    %c0_i32 = arith.constant 0 : i32
    %c0_i32_0 = arith.constant 0 : i32
    %c0_i32_1 = arith.constant 0 : i32
    return %c0_i32, %c0_i32_0 : i32, i32
  }
  func.func @transform_6(%arg0: i32) -> (i32, i32) {
    %c0_i32 = arith.constant 0 : i32
    %c0_i32_0 = arith.constant 0 : i32
    %c0_i32_1 = arith.constant 0 : i32
    return %c0_i32, %c0_i32_0 : i32, i32
  }
  func.func @transform_7(%arg0: i32) -> (i32, i32, i32) {
    %c0_i32 = arith.constant 0 : i32
    %c0_i32_0 = arith.constant 0 : i32
    %c0_i32_1 = arith.constant 0 : i32
    return %arg0, %c0_i32, %c0_i32_0 : i32, i32, i32
  }
}

</mosaic_0001>

<llo_original>
// kernel: tpu_custom_call.1
$region0: #{tpu_custom_call.1}
  #allocation0 [shape = 'u32[]', space=smem, size = 0x4, offset = 0x4, fixed_abs, tag = 'smem constant byte address 0x4 - core index']
  #allocation1 [shape = 'u32[144,128]{1,0:T(1,128)}', space=vmem, size = 0x12000, scoped, tag = 'internal scratch']
  %s0 = inlined_call_operand.hbm [shape: f32[2,8,128], index: 0, kind: input, shape index: {}]
  %s1 = inlined_call_operand.hbm [shape: bf16[128,384], index: 1, kind: input, shape index: {}]
  %s2 = inlined_call_operand.hbm [shape: bf16[128,128], index: 2, kind: input, shape index: {}]
  %s3 = inlined_call_operand.hbm [shape: bf16[128,512], index: 3, kind: input, shape index: {}]
  %s4 = inlined_call_operand.hbm [shape: bf16[512,128], index: 4, kind: input, shape index: {}]
  %s5 = inlined_call_operand.vmem [shape: f32[8,128], index: 5, kind: input, shape index: {}]
  %s6 = inlined_call_operand.vmem [shape: f32[1,512], index: 6, kind: input, shape index: {}]
  %s7 = inlined_call_operand.hbm [shape: f32[2,8,128], index: 7, kind: output, shape index: {}]
  %s8 = sld [smem:[#allocation0]]
  $region58: #{tpu_custom_call.1} parent=0
    _
  %s10 = ssub.s32 1, %s8
  %s11 = scalar_select 0, %s10, %s8
  $region1: #{tpu_custom_call.1} parent=0
    #allocation2 [shape = 'u8[8192]{0}', space=vmem, size = 0x2000, scoped, tag = 'input window, operand 0, single buffered']
    #allocation3 [shape = 's32[1]{0}', space=sflag, size = 0x4, scoped, tag = 'scoped memory for tpu_custom_call.1']
    #allocation4 [shape = 's32[1]{0}', space=sflag, size = 0x4, scoped, tag = 'scoped memory for tpu_custom_call.1']
    #allocation5 [shape = 'u8[98304]{0}', space=vmem, size = 0x18000, scoped, tag = 'input window, operand 1, single buffered']
    #allocation6 [shape = 's32[1]{0}', space=sflag, size = 0x4, scoped, tag = 'scoped memory for tpu_custom_call.1']
    #allocation7 [shape = 'u8[32768]{0}', space=vmem, size = 0x8000, scoped, tag = 'input window, operand 2, single buffered']
    #allocation8 [shape = 'u8[131072]{0}', space=vmem, size = 0x20000, scoped, tag = 'input window, operand 3, single buffered']
    #allocation9 [shape = 's32[1]{0}', space=sflag, size = 0x4, scoped, tag = 'scoped memory for tpu_custom_call.1']
    #allocation10 [shape = 'u8[131072]{0}', space=vmem, size = 0x20000, scoped, tag = 'input window, operand 4, single buffered']
    #allocation11 [shape = 'u8[8192]{0}', space=vmem, size = 0x2000, scoped, tag = 'output window, operand 0, single buffered']
    %12 = vsyncpa [#allocation3], 0
    %13 = vsyncpa [#allocation6], 0
    %14 = vsyncpa [#allocation9], 0
    %15 = vsyncpa [#allocation4], 0
    // Predicated region
    $region2: #{tpu_custom_call.1} parent=1 // pred_check
      _
    $region3: #{tpu_custom_call.1} parent=1 // pred_check_branch
      %17 = sbr.rel (0) target = $region5
    $region4: #{tpu_custom_call.1} parent=1 // pred_region
      %s19 = ssub.s32 256, 256
      %20 = vsyncadd [#allocation3], %s19
      %s21 = sshll.u32 [#allocation2], 4
      %s22 = int_to_ptr.vmem [resolvable:$true] %s21
      %27 = dma.hbm_to_vmem [thread:$0]  %s0, 256, %s22, [#allocation3], 128, 128, 8
    $region5: #{tpu_custom_call.1} parent=1 // pred_fallthru
      _
    // Predicated region
    $region6: #{tpu_custom_call.1} parent=1 // pred_check
      _
    $region7: #{tpu_custom_call.1} parent=1 // pred_check_branch
      %29 = sbr.rel (0) target = $region9
    $region8: #{tpu_custom_call.1} parent=1 // pred_region
      %s31 = ssub.s32 3072, 3072
      %32 = vsyncadd [#allocation6], %s31
      %s33 = sshll.u32 [#allocation5], 4
      %s34 = int_to_ptr.vmem [resolvable:$true] %s33
      %39 = dma.hbm_to_vmem [thread:$0]  %s1, 3072, %s34, [#allocation6], 192, 192, 12
    $region9: #{tpu_custom_call.1} parent=1 // pred_fallthru
      _
    // Predicated region
    $region10: #{tpu_custom_call.1} parent=1 // pred_check
      _
    $region11: #{tpu_custom_call.1} parent=1 // pred_check_branch
      %41 = sbr.rel (0) target = $region13
    $region12: #{tpu_custom_call.1} parent=1 // pred_region
      %s43 = ssub.s32 1024, 1024
      %44 = vsyncadd [#allocation6], %s43
      %s45 = sshll.u32 [#allocation7], 4
      %s46 = int_to_ptr.vmem [resolvable:$true] %s45
      %51 = dma.hbm_to_vmem [thread:$0]  %s2, 1024, %s46, [#allocation6], 64, 64, 4
    $region13: #{tpu_custom_call.1} parent=1 // pred_fallthru
      _
    // Predicated region
    $region14: #{tpu_custom_call.1} parent=1 // pred_check
      _
    $region15: #{tpu_custom_call.1} parent=1 // pred_check_branch
      %53 = sbr.rel (0) target = $region17
    $region16: #{tpu_custom_call.1} parent=1 // pred_region
      %s55 = ssub.s32 4096, 4096
      %56 = vsyncadd [#allocation9], %s55
      %s57 = sshll.u32 [#allocation8], 4
      %s58 = int_to_ptr.vmem [resolvable:$true] %s57
      %63 = dma.hbm_to_vmem [thread:$0]  %s3, 4096, %s58, [#allocation9], 256, 256, 16
    $region17: #{tpu_custom_call.1} parent=1 // pred_fallthru
      _
    // Predicated region
    $region18: #{tpu_custom_call.1} parent=1 // pred_check
      _
    $region19: #{tpu_custom_call.1} parent=1 // pred_check_branch
      %65 = sbr.rel (0) target = $region21
    $region20: #{tpu_custom_call.1} parent=1 // pred_region
      %s67 = ssub.s32 4096, 4096
      %68 = vsyncadd [#allocation9], %s67
      %s69 = sshll.u32 [#allocation10], 4
      %s70 = int_to_ptr.vmem [resolvable:$true] %s69
      %75 = dma.hbm_to_vmem [thread:$0]  %s4, 4096, %s70, [#allocation9], 64, 64, 4
    $region21: #{tpu_custom_call.1} parent=1 // pred_fallthru
      _
    // Predicated region
    $region22: #{tpu_custom_call.1} parent=1 // pred_check
      _
    $region23: #{tpu_custom_call.1} parent=1 // pred_check_branch
      %77 = sbr.rel (0) target = $region25
    $region24: #{tpu_custom_call.1} parent=1 // pred_region
      _
    $region25: #{tpu_custom_call.1} parent=1 // pred_fallthru
      _
    // Predicated region
    $region26: #{tpu_custom_call.1} parent=1 // pred_check
      _
    $region27: #{tpu_custom_call.1} parent=1 // pred_check_branch
      %79 = sbr.rel (0) target = $region29
    $region28: #{tpu_custom_call.1} parent=1 // pred_region
      _
    $region29: #{tpu_custom_call.1} parent=1 // pred_fallthru
      _
    // Predicated region
    $region30: #{tpu_custom_call.1} parent=1 // pred_check
      _
    $region31: #{tpu_custom_call.1} parent=1 // pred_check_branch
      %81 = sbr.rel (0) target = $region33
    $region32: #{tpu_custom_call.1} parent=1 // pred_region
      %82 = dma.done [#allocation3], 256
    $region33: #{tpu_custom_call.1} parent=1 // pred_fallthru
      _
    // Predicated region
    $region34: #{tpu_custom_call.1} parent=1 // pred_check
      _
    $region35: #{tpu_custom_call.1} parent=1 // pred_check_branch
      %84 = sbr.rel (0) target = $region37
    $region36: #{tpu_custom_call.1} parent=1 // pred_region
      %85 = dma.done [#allocation6], 3072
    $region37: #{tpu_custom_call.1} parent=1 // pred_fallthru
      _
    // Predicated region
    $region38: #{tpu_custom_call.1} parent=1 // pred_check
      _
    $region39: #{tpu_custom_call.1} parent=1 // pred_check_branch
      %87 = sbr.rel (0) target = $region41
    $region40: #{tpu_custom_call.1} parent=1 // pred_region
      %88 = dma.done [#allocation6], 1024
    $region41: #{tpu_custom_call.1} parent=1 // pred_fallthru
      _
    // Predicated region
    $region42: #{tpu_custom_call.1} parent=1 // pred_check
      _
    $region43: #{tpu_custom_call.1} parent=1 // pred_check_branch
      %90 = sbr.rel (0) target = $region45
    $region44: #{tpu_custom_call.1} parent=1 // pred_region
      %91 = dma.done [#allocation9], 4096
    $region45: #{tpu_custom_call.1} parent=1 // pred_fallthru
      _
    // Predicated region
    $region46: #{tpu_custom_call.1} parent=1 // pred_check
      _
    $region47: #{tpu_custom_call.1} parent=1 // pred_check_branch
      %93 = sbr.rel (0) target = $region49
    $region48: #{tpu_custom_call.1} parent=1 // pred_region
      %94 = dma.done [#allocation9], 4096
    $region49: #{tpu_custom_call.1} parent=1 // pred_fallthru
      _
    %v96 = vld [vmem:[#allocation2] sm:$0xff]
    %v97 = vld [vmem:[#allocation2 + $0x8] sm:$0xff]
    %v98 = vld [vmem:[%s5] sm:$0x1]
    %v99 = vld [vmem:[%s5 + $0x1] sm:$0x1]
    %v100 = vld [vmem:[%s5 + $0x2] sm:$0x1]
    %v101 = vld [vmem:[%s5 + $0x3] sm:$0x1]
    %v102 = vld [vmem:[%s5 + $0x4] sm:$0x1]
    %v103 = vld [vmem:[%s5 + $0x5] sm:$0x1]
    %v104 = vld [vmem:[%s6] sm:$0xf]
    %105 = vadd.xlane.f32.xlu0 %v96
    %v106 = vpop.xlane.xlu0 %105
    %107 = vadd.xlane.f32.xlu0 %v97
    %v108 = vpop.xlane.xlu0 %107
    %v109 = vrcp.pop 128.0
    %v110 = vmul.f32 %v106, %v109
    %v111 = vmul.f32 %v108, %v109
    %v112 = vsub.f32 %v96, %v110
    %v113 = vsub.f32 %v97, %v111
    %v114 = vmul.f32 %v112, %v112
    %v115 = vmul.f32 %v113, %v113
    %116 = vadd.xlane.f32.xlu0 %v114
    %v117 = vpop.xlane.xlu0 %116
    %118 = vadd.xlane.f32.xlu0 %v115
    %v119 = vpop.xlane.xlu0 %118
    %v120 = vmul.f32 %v117, %v109
    %v121 = vmul.f32 %v119, %v109
    %v122 = vadd.f32 %v120, 1e-05
    %v123 = vadd.f32 %v121, 1e-05
    %v124 = vrsqrt.pop %v122
    %v125 = vrsqrt.pop %v123
    %v126 = vmul.f32 %v112, %v124
    %v127 = vmul.f32 %v113, %v125
    %v128 = vlaneseq
    %v129 = vshrl.u32 %v128, 7
    %v130 = vsub.s32 0, %v129
    %v131 = vrot.slane %v98, %v130
    %v132 = vmul.f32 %v126, %v131
    %v133 = vmul.f32 %v127, %v131
    %v134 = vlaneseq
    %v135 = vshrl.u32 %v134, 7
    %v136 = vsub.s32 0, %v135
    %v137 = vrot.slane %v99, %v136
    %v138 = vadd.f32 %v132, %v137
    %v139 = vadd.f32 %v133, %v137
    %v140 = vpack.c.bf16 %v139, %v138
    %v141 = vld [vmem:[#allocation5] sm:$0xff]
    %v142 = vld [vmem:[#allocation5 + $0x8] sm:$0xf]
    %v143 = vld [vmem:[#allocation5 + $0xc] sm:$0xff]
    %v144 = vld [vmem:[#allocation5 + $0x14] sm:$0xf]
    %v145 = vld [vmem:[#allocation5 + $0x18] sm:$0xff]
    %v146 = vld [vmem:[#allocation5 + $0x20] sm:$0xf]
    %v147 = vld [vmem:[#allocation5 + $0x24] sm:$0xff]
    %v148 = vld [vmem:[#allocation5 + $0x2c] sm:$0xf]
    %v149 = vld [vmem:[#allocation5 + $0x30] sm:$0xff]
    %v150 = vld [vmem:[#allocation5 + $0x38] sm:$0xf]
    %v151 = vld [vmem:[#allocation5 + $0x3c] sm:$0xff]
    %v152 = vld [vmem:[#allocation5 + $0x44] sm:$0xf]
    %v153 = vld [vmem:[#allocation5 + $0x48] sm:$0xff]
    %v154 = vld [vmem:[#allocation5 + $0x50] sm:$0xf]
    %v155 = vld [vmem:[#allocation5 + $0x54] sm:$0xff]
    %v156 = vld [vmem:[#allocation5 + $0x5c] sm:$0xf]
    %v157 = vld [vmem:[#allocation5 + $0x60] sm:$0xff]
    %v158 = vld [vmem:[#allocation5 + $0x68] sm:$0xf]
    %v159 = vld [vmem:[#allocation5 + $0x6c] sm:$0xff]
    %v160 = vld [vmem:[#allocation5 + $0x74] sm:$0xf]
    %v161 = vld [vmem:[#allocation5 + $0x78] sm:$0xff]
    %v162 = vld [vmem:[#allocation5 + $0x80] sm:$0xf]
    %v163 = vld [vmem:[#allocation5 + $0x84] sm:$0xff]
    %v164 = vld [vmem:[#allocation5 + $0x8c] sm:$0xf]
    %v165 = vld [vmem:[#allocation5 + $0x90] sm:$0xff]
    %v166 = vld [vmem:[#allocation5 + $0x98] sm:$0xf]
    %v167 = vld [vmem:[#allocation5 + $0x9c] sm:$0xff]
    %v168 = vld [vmem:[#allocation5 + $0xa4] sm:$0xf]
    %v169 = vld [vmem:[#allocation5 + $0xa8] sm:$0xff]
    %v170 = vld [vmem:[#allocation5 + $0xb0] sm:$0xf]
    %v171 = vld [vmem:[#allocation5 + $0xb4] sm:$0xff]
    %v172 = vld [vmem:[#allocation5 + $0xbc] sm:$0xf]
    %v205 = vunpack.c.l.b16 %v141
    %v206 = vunpack.c.h.b16 %v141
    %v207 = vunpack.c.l.b16 %v142
    %v208 = vunpack.c.l.b16 %v143
    %v209 = vunpack.c.h.b16 %v143
    %v210 = vunpack.c.l.b16 %v144
    %v211 = vunpack.c.l.b16 %v145
    %v212 = vunpack.c.h.b16 %v145
    %v213 = vunpack.c.l.b16 %v146
    %v214 = vunpack.c.l.b16 %v147
    %v215 = vunpack.c.h.b16 %v147
    %v216 = vunpack.c.l.b16 %v148
    %v217 = vunpack.c.l.b16 %v149
    %v218 = vunpack.c.h.b16 %v149
    %v219 = vunpack.c.l.b16 %v150
    %v220 = vunpack.c.l.b16 %v151
    %v221 = vunpack.c.h.b16 %v151
    %v222 = vunpack.c.l.b16 %v152
    %v223 = vunpack.c.l.b16 %v153
    %v224 = vunpack.c.h.b16 %v153
    %v225 = vunpack.c.l.b16 %v154
    %v226 = vunpack.c.l.b16 %v155
    %v227 = vunpack.c.h.b16 %v155
    %v228 = vunpack.c.l.b16 %v156
    %v229 = vunpack.c.l.b16 %v157
    %v230 = vunpack.c.h.b16 %v157
    %v231 = vunpack.c.l.b16 %v158
    %v232 = vunpack.c.l.b16 %v159
    %v233 = vunpack.c.h.b16 %v159
    %v234 = vunpack.c.l.b16 %v160
    %v235 = vunpack.c.l.b16 %v161
    %v236 = vunpack.c.h.b16 %v161
    %v237 = vunpack.c.l.b16 %v162
    %v238 = vunpack.c.l.b16 %v163
    %v239 = vunpack.c.h.b16 %v163
    %v240 = vunpack.c.l.b16 %v164
    %v241 = vunpack.c.l.b16 %v165
    %v242 = vunpack.c.h.b16 %v165
    %v243 = vunpack.c.l.b16 %v166
    %v244 = vunpack.c.l.b16 %v167
    %v245 = vunpack.c.h.b16 %v167
    %v246 = vunpack.c.l.b16 %v168
    %v247 = vunpack.c.l.b16 %v169
    %v248 = vunpack.c.h.b16 %v169
    %v249 = vunpack.c.l.b16 %v170
    %v250 = vunpack.c.l.b16 %v171
    %v251 = vunpack.c.h.b16 %v171
    %v252 = vunpack.c.l.b16 %v172
    %v253 = vpack.c.b16 %v208, %v205
    %v254 = vpack.c.b16 %v209, %v206
    %v255 = vpack.c.b16 %v210, %v207
    %v256 = vpack.c.b16 %v214, %v211
    %v257 = vpack.c.b16 %v215, %v212
    %v258 = vpack.c.b16 %v216, %v213
    %v259 = vpack.c.b16 %v220, %v217
    %v260 = vpack.c.b16 %v221, %v218
    %v261 = vpack.c.b16 %v222, %v219
    %v262 = vpack.c.b16 %v226, %v223
    %v263 = vpack.c.b16 %v227, %v224
    %v264 = vpack.c.b16 %v228, %v225
    %v265 = vpack.c.b16 %v232, %v229
    %v266 = vpack.c.b16 %v233, %v230
    %v267 = vpack.c.b16 %v234, %v231
    %v268 = vpack.c.b16 %v238, %v235
    %v269 = vpack.c.b16 %v239, %v236
    %v270 = vpack.c.b16 %v240, %v237
    %v271 = vpack.c.b16 %v244, %v241
    %v272 = vpack.c.b16 %v245, %v242
    %v273 = vpack.c.b16 %v246, %v243
    %v274 = vpack.c.b16 %v250, %v247
    %v275 = vpack.c.b16 %v251, %v248
    %v276 = vpack.c.b16 %v252, %v249
    %301 = vmatprep.subr.bf16.mxu0 %v254
    %302 = vmatpush1.bf16.msra.mxu0 %v253
    %303 = vmatprep.subr.bf16.mxu0 %v257
    %304 = vmatpush1.bf16.msra.mxu0 %v256
    %305 = vmatprep.subr.bf16.mxu0 %v260
    %306 = vmatpush1.bf16.msra.mxu0 %v259
    %307 = vmatprep.subr.bf16.mxu0 %v263
    %308 = vmatpush1.bf16.msra.mxu0 %v262
    %309 = vmatprep.subr.bf16.mxu0 %v266
    %310 = vmatpush1.bf16.msra.mxu0 %v265
    %311 = vmatprep.subr.bf16.mxu0 %v269
    %312 = vmatpush1.bf16.msra.mxu0 %v268
    %313 = vmatprep.subr.bf16.mxu0 %v272
    %314 = vmatpush1.bf16.msra.mxu0 %v271
    %315 = vmatprep.subr.bf16.mxu0 %v275
    %316 = vmatpush1.bf16.msra.mxu0 %v274
    %317 = vmatprep.subr.bf16.mxu0 0
    %318 = vmatpush1.bf16.msra.mxu0 0
    %319 = vmatprep.subr.bf16.mxu0 0
    %320 = vmatpush1.bf16.msra.mxu0 0
    %321 = vmatprep.subr.bf16.mxu0 0
    %322 = vmatpush1.bf16.msra.mxu0 0
    %323 = vmatprep.subr.bf16.mxu0 0
    %324 = vmatpush1.bf16.msra.mxu0 0
    %325 = vmatprep.subr.bf16.mxu0 0
    %326 = vmatpush1.bf16.msra.mxu0 0
    %327 = vmatprep.subr.bf16.mxu0 0
    %328 = vmatpush1.bf16.msra.mxu0 0
    %329 = vmatprep.subr.bf16.mxu0 0
    %330 = vmatpush1.bf16.msra.mxu0 0
    %331 = vmatprep.subr.bf16.mxu0 0
    %332 = vmatpush1.bf16.msra.mxu0 0
    %333 = vmatprep.mubr.bf16.mxu0 0
    %334 = vmatmul.mubr.bf16.gmra.mrb[0].mxu0 %v140
    %v335 = vpop.f32.mrb[0].mxu0
    %v336 = vadd.f32 0.0, %v335
    %v337 = vpop.f32.mrb[0].mxu0
    %v338 = vadd.f32 0.0, %v337
    %v339 = vpop.f32.mrb[0].mxu0
    %v340 = vadd.f32 0.0, %v339
    %v341 = vpop.f32.mrb[0].mxu0
    %v342 = vadd.f32 0.0, %v341
    %343 = vdwg.mxu0
    %344 = vmatprep.subr.bf16.mxu0 0
    %345 = vmatpush1.bf16.msra.mxu0 %v255
    %346 = vmatprep.subr.bf16.mxu0 0
    %347 = vmatpush1.bf16.msra.mxu0 %v258
    %348 = vmatprep.subr.bf16.mxu0 0
    %349 = vmatpush1.bf16.msra.mxu0 %v261
    %350 = vmatprep.subr.bf16.mxu0 0
    %351 = vmatpush1.bf16.msra.mxu0 %v264
    %352 = vmatprep.subr.bf16.mxu0 0
    %353 = vmatpush1.bf16.msra.mxu0 %v267
    %354 = vmatprep.subr.bf16.mxu0 0
    %355 = vmatpush1.bf16.msra.mxu0 %v270
    %356 = vmatprep.subr.bf16.mxu0 0
    %357 = vmatpush1.bf16.msra.mxu0 %v273
    %358 = vmatprep.subr.bf16.mxu0 0
    %359 = vmatpush1.bf16.msra.mxu0 %v276
    %360 = vmatprep.subr.bf16.mxu0 0
    %361 = vmatpush1.bf16.msra.mxu0 0
    %362 = vmatprep.subr.bf16.mxu0 0
    %363 = vmatpush1.bf16.msra.mxu0 0
    %364 = vmatprep.subr.bf16.mxu0 0
    %365 = vmatpush1.bf16.msra.mxu0 0
    %366 = vmatprep.subr.bf16.mxu0 0
    %367 = vmatpush1.bf16.msra.mxu0 0
    %368 = vmatprep.subr.bf16.mxu0 0
    %369 = vmatpush1.bf16.msra.mxu0 0
    %370 = vmatprep.subr.bf16.mxu0 0
    %371 = vmatpush1.bf16.msra.mxu0 0
    %372 = vmatprep.subr.bf16.mxu0 0
    %373 = vmatpush1.bf16.msra.mxu0 0
    %374 = vmatprep.subr.bf16.mxu0 0
    %375 = vmatpush1.bf16.msra.mxu0 0
    %376 = vmatprep.mubr.bf16.mxu0 0
    %377 = vmatmul.mubr.bf16.gmra.mrb[0].mxu0 %v140
    %v378 = vpop.f32.mrb[0].mxu0
    %v379 = vadd.f32 0.0, %v378
    %v380 = vpop.f32.mrb[0].mxu0
    %v381 = vpop.f32.mrb[0].mxu0
    %v382 = vadd.f32 0.0, %v381
    %v383 = vpop.f32.mrb[0].mxu0
    %384 = vdwg.mxu0
    %v385 = vlaneseq
    %v386 = vshrl.u32 %v385, 7
    %v387 = vlaneseq
    %v388 = vand.u32 %v387, 127
    %vm389 = vcmp.ge.s32.totalorder %v386, %v388
    %v390 = vsel %vm389, 0.0, -1e+30
    %v391 = vpack.c.bf16 %v336, %v336
    %v392 = vpack.c.bf16 %v338, %v338
    %v393 = vpack.c.bf16 %v379, %v379
    %vm394 = vcmask 261120
    %v396 = vsel %vm394, %v391, 0
    %v399 = vsel %vm394, %v392, 0
    %401 = vmatprep.subr.bf16.mxu0 0
    %402 = vmatpush1.bf16.xpose.msra.mxu0 %v399
    %403 = vmatprep.subr.bf16.mxu0 0
    %404 = vmatpush1.bf16.xpose.msra.mxu0 0
    %405 = vmatprep.subr.bf16.mxu0 0
    %406 = vmatpush1.bf16.xpose.msra.mxu0 0
    %407 = vmatprep.subr.bf16.mxu0 0
    %408 = vmatpush1.bf16.xpose.msra.mxu0 0
    %409 = vmatprep.subr.bf16.mxu0 0
    %410 = vmatpush1.bf16.xpose.msra.mxu0 0
    %411 = vmatprep.subr.bf16.mxu0 0
    %412 = vmatpush1.bf16.xpose.msra.mxu0 0
    %413 = vmatprep.subr.bf16.mxu0 0
    %414 = vmatpush1.bf16.xpose.msra.mxu0 0
    %415 = vmatprep.subr.bf16.mxu0 0
    %416 = vmatpush1.bf16.xpose.msra.mxu0 0
    %417 = vmatprep.subr.bf16.mxu0 0
    %418 = vmatpush1.bf16.xpose.msra.mxu0 0
    %419 = vmatprep.subr.bf16.mxu0 0
    %420 = vmatpush1.bf16.xpose.msra.mxu0 0
    %421 = vmatprep.subr.bf16.mxu0 0
    %422 = vmatpush1.bf16.xpose.msra.mxu0 0
    %423 = vmatprep.subr.bf16.mxu0 0
    %424 = vmatpush1.bf16.xpose.msra.mxu0 0
    %425 = vmatprep.subr.bf16.mxu0 0
    %426 = vmatpush1.bf16.xpose.msra.mxu0 0
    %427 = vmatprep.subr.bf16.mxu0 0
    %428 = vmatpush1.bf16.xpose.msra.mxu0 0
    %429 = vmatprep.subr.bf16.mxu0 0
    %430 = vmatpush1.bf16.xpose.msra.mxu0 0
    %431 = vmatprep.subr.bf16.mxu0 0
    %432 = vmatpush1.bf16.xpose.msra.mxu0 0
    %433 = vmatprep.mubr.bf16.mxu0 0
    %434 = vmatmul.mubr.bf16.gmra.mrb[0].mxu0 %v396
    %v435 = vpop.f32.mrb[0].mxu0
    %v436 = vadd.f32 %v390, %v435
    %v437 = vpop.f32.mrb[0].mxu0
    %v438 = vpop.f32.mrb[0].mxu0
    %v439 = vpop.f32.mrb[0].mxu0
    %440 = vdwg.mxu0
    %vm441 = vcmask 64512
    %v442 = vsel %vm441, %v436, -inf
    %443 = vmax.xlane.f32.xlu0 %v442
    %v444 = vpop.xlane.xlu0 %443
    %v445 = vsub.f32 %v436, %v444
    %v446 = vmul.f32 %v445, 1.442695
    %v447 = vpow.pop %v446
    %v448 = vsel %vm441, %v447, 0.0
    %449 = vadd.xlane.f32.xlu0 %v448
    %v450 = vpop.xlane.xlu0 %449
    %v451 = vrcp.pop %v450
    %v452 = vmul.f32 %v447, %v451
    %v453 = vpack.c.bf16 %v452, %v452
    %v455 = vsel %vm441, %v453, 0
    %vm457 = vcmask 1043456
    %v459 = vsel %vm457, %v393, 0
    %461 = vmatprep.subr.bf16.mxu0 0
    %462 = vmatpush1.bf16.msra.mxu0 %v459
    %463 = vmatprep.subr.bf16.mxu0 0
    %464 = vmatpush1.bf16.msra.mxu0 0
    %465 = vmatprep.subr.bf16.mxu0 0
    %466 = vmatpush1.bf16.msra.mxu0 0
    %467 = vmatprep.subr.bf16.mxu0 0
    %468 = vmatpush1.bf16.msra.mxu0 0
    %469 = vmatprep.subr.bf16.mxu0 0
    %470 = vmatpush1.bf16.msra.mxu0 0
    %471 = vmatprep.subr.bf16.mxu0 0
    %472 = vmatpush1.bf16.msra.mxu0 0
    %473 = vmatprep.subr.bf16.mxu0 0
    %474 = vmatpush1.bf16.msra.mxu0 0
    %475 = vmatprep.subr.bf16.mxu0 0
    %476 = vmatpush1.bf16.msra.mxu0 0
    %477 = vmatprep.subr.bf16.mxu0 0
    %478 = vmatpush1.bf16.msra.mxu0 0
    %479 = vmatprep.subr.bf16.mxu0 0
    %480 = vmatpush1.bf16.msra.mxu0 0
    %481 = vmatprep.subr.bf16.mxu0 0
    %482 = vmatpush1.bf16.msra.mxu0 0
    %483 = vmatprep.subr.bf16.mxu0 0
    %484 = vmatpush1.bf16.msra.mxu0 0
    %485 = vmatprep.subr.bf16.mxu0 0
    %486 = vmatpush1.bf16.msra.mxu0 0
    %487 = vmatprep.subr.bf16.mxu0 0
    %488 = vmatpush1.bf16.msra.mxu0 0
    %489 = vmatprep.subr.bf16.mxu0 0
    %490 = vmatpush1.bf16.msra.mxu0 0
    %491 = vmatprep.subr.bf16.mxu0 0
    %492 = vmatpush1.bf16.msra.mxu0 0
    %493 = vmatprep.mubr.bf16.mxu0 0
    %494 = vmatmul.mubr.bf16.gmra.mrb[0].mxu0 %v455
    %v495 = vpop.f32.mrb[0].mxu0
    %v496 = vadd.f32 0.0, %v495
    %v497 = vpop.f32.mrb[0].mxu0
    %v498 = vpop.f32.mrb[0].mxu0
    %v499 = vpop.f32.mrb[0].mxu0
    %500 = vdwg.mxu0
    %v501 = vpack.c.bf16 %v496, %v496
    %v502 = vld [vmem:[#allocation7] sm:$0xf]
    %v503 = vld [vmem:[#allocation7 + $0x4] sm:$0xf]
    %v504 = vld [vmem:[#allocation7 + $0x8] sm:$0xf]
    %v505 = vld [vmem:[#allocation7 + $0xc] sm:$0xf]
    %507 = vrot.lane.b32.xlu0 %v391, 96
    %v508 = vpop.permute.xlu0 %507
    %510 = vrot.lane.b32.xlu0 %v392, 96
    %v511 = vpop.permute.xlu0 %510
    %v513 = vsel %vm394, %v508, 0
    %v516 = vsel %vm394, %v511, 0
    %518 = vmatprep.subr.bf16.mxu0 0
    %519 = vmatpush1.bf16.xpose.msra.mxu0 %v516
    %520 = vmatprep.subr.bf16.mxu0 0
    %521 = vmatpush1.bf16.xpose.msra.mxu0 0
    %522 = vmatprep.subr.bf16.mxu0 0
    %523 = vmatpush1.bf16.xpose.msra.mxu0 0
    %524 = vmatprep.subr.bf16.mxu0 0
    %525 = vmatpush1.bf16.xpose.msra.mxu0 0
    %526 = vmatprep.subr.bf16.mxu0 0
    %527 = vmatpush1.bf16.xpose.msra.mxu0 0
    %528 = vmatprep.subr.bf16.mxu0 0
    %529 = vmatpush1.bf16.xpose.msra.mxu0 0
    %530 = vmatprep.subr.bf16.mxu0 0
    %531 = vmatpush1.bf16.xpose.msra.mxu0 0
    %532 = vmatprep.subr.bf16.mxu0 0
    %533 = vmatpush1.bf16.xpose.msra.mxu0 0
    %534 = vmatprep.subr.bf16.mxu0 0
    %535 = vmatpush1.bf16.xpose.msra.mxu0 0
    %536 = vmatprep.subr.bf16.mxu0 0
    %537 = vmatpush1.bf16.xpose.msra.mxu0 0
    %538 = vmatprep.subr.bf16.mxu0 0
    %539 = vmatpush1.bf16.xpose.msra.mxu0 0
    %540 = vmatprep.subr.bf16.mxu0 0
    %541 = vmatpush1.bf16.xpose.msra.mxu0 0
    %542 = vmatprep.subr.bf16.mxu0 0
    %543 = vmatpush1.bf16.xpose.msra.mxu0 0
    %544 = vmatprep.subr.bf16.mxu0 0
    %545 = vmatpush1.bf16.xpose.msra.mxu0 0
    %546 = vmatprep.subr.bf16.mxu0 0
    %547 = vmatpush1.bf16.xpose.msra.mxu0 0
    %548 = vmatprep.subr.bf16.mxu0 0
    %549 = vmatpush1.bf16.xpose.msra.mxu0 0
    %550 = vmatprep.mubr.bf16.mxu0 0
    %551 = vmatmul.mubr.bf16.gmra.mrb[0].mxu0 %v513
    %v552 = vpop.f32.mrb[0].mxu0
    %v553 = vadd.f32 %v390, %v552
    %v554 = vpop.f32.mrb[0].mxu0
    %v555 = vpop.f32.mrb[0].mxu0
    %v556 = vpop.f32.mrb[0].mxu0
    %557 = vdwg.mxu0
    %v558 = vsel %vm441, %v553, -inf
    %559 = vmax.xlane.f32.xlu0 %v558
    %v560 = vpop.xlane.xlu0 %559
    %v561 = vsub.f32 %v553, %v560
    %v562 = vmul.f32 %v561, 1.442695
    %v563 = vpow.pop %v562
    %v564 = vsel %vm441, %v563, 0.0
    %565 = vadd.xlane.f32.xlu0 %v564
    %v566 = vpop.xlane.xlu0 %565
    %v567 = vrcp.pop %v566
    %v568 = vmul.f32 %v563, %v567
    %v569 = vpack.c.bf16 %v568, %v568
    %571 = vrot.lane.b32.xlu0 %v393, 96
    %v572 = vpop.permute.xlu0 %571
    %v574 = vsel %vm441, %v569, 0
    %v577 = vsel %vm457, %v572, 0
    %579 = vmatprep.subr.bf16.mxu0 0
    %580 = vmatpush1.bf16.msra.mxu0 %v577
    %581 = vmatprep.subr.bf16.mxu0 0
    %582 = vmatpush1.bf16.msra.mxu0 0
    %583 = vmatprep.subr.bf16.mxu0 0
    %584 = vmatpush1.bf16.msra.mxu0 0
    %585 = vmatprep.subr.bf16.mxu0 0
    %586 = vmatpush1.bf16.msra.mxu0 0
    %587 = vmatprep.subr.bf16.mxu0 0
    %588 = vmatpush1.bf16.msra.mxu0 0
    %589 = vmatprep.subr.bf16.mxu0 0
    %590 = vmatpush1.bf16.msra.mxu0 0
    %591 = vmatprep.subr.bf16.mxu0 0
    %592 = vmatpush1.bf16.msra.mxu0 0
    %593 = vmatprep.subr.bf16.mxu0 0
    %594 = vmatpush1.bf16.msra.mxu0 0
    %595 = vmatprep.subr.bf16.mxu0 0
    %596 = vmatpush1.bf16.msra.mxu0 0
    %597 = vmatprep.subr.bf16.mxu0 0
    %598 = vmatpush1.bf16.msra.mxu0 0
    %599 = vmatprep.subr.bf16.mxu0 0
    %600 = vmatpush1.bf16.msra.mxu0 0
    %601 = vmatprep.subr.bf16.mxu0 0
    %602 = vmatpush1.bf16.msra.mxu0 0
    %603 = vmatprep.subr.bf16.mxu0 0
    %604 = vmatpush1.bf16.msra.mxu0 0
    %605 = vmatprep.subr.bf16.mxu0 0
    %606 = vmatpush1.bf16.msra.mxu0 0
    %607 = vmatprep.subr.bf16.mxu0 0
    %608 = vmatpush1.bf16.msra.mxu0 0
    %609 = vmatprep.subr.bf16.mxu0 0
    %610 = vmatpush1.bf16.msra.mxu0 0
    %611 = vmatprep.mubr.bf16.mxu0 0
    %612 = vmatmul.mubr.bf16.gmra.mrb[0].mxu0 %v574
    %v613 = vpop.f32.mrb[0].mxu0
    %v614 = vadd.f32 0.0, %v613
    %v615 = vpop.f32.mrb[0].mxu0
    %v616 = vpop.f32.mrb[0].mxu0
    %v617 = vpop.f32.mrb[0].mxu0
    %618 = vdwg.mxu0
    %v619 = vpack.c.bf16 %v614, %v614
    %v620 = vld [vmem:[#allocation7 + $0x10] sm:$0xf]
    %v621 = vld [vmem:[#allocation7 + $0x14] sm:$0xf]
    %v622 = vld [vmem:[#allocation7 + $0x18] sm:$0xf]
    %v623 = vld [vmem:[#allocation7 + $0x1c] sm:$0xf]
    %v628 = vunpack.c.l.b16 %v620
    %v629 = vunpack.c.l.b16 %v621
    %v630 = vunpack.c.l.b16 %v622
    %v631 = vunpack.c.l.b16 %v623
    %v632 = vpack.c.b16 %v629, %v628
    %v633 = vpack.c.b16 %v631, %v630
    %v637 = vsel %vm394, %v619, 0
    %639 = vmatprep.subr.bf16.mxu0 0
    %640 = vmatpush1.bf16.msra.mxu0 %v632
    %641 = vmatprep.subr.bf16.mxu0 0
    %642 = vmatpush1.bf16.msra.mxu0 %v633
    %643 = vmatprep.subr.bf16.mxu0 0
    %644 = vmatpush1.bf16.msra.mxu0 0
    %645 = vmatprep.subr.bf16.mxu0 0
    %646 = vmatpush1.bf16.msra.mxu0 0
    %647 = vmatprep.subr.bf16.mxu0 0
    %648 = vmatpush1.bf16.msra.mxu0 0
    %649 = vmatprep.subr.bf16.mxu0 0
    %650 = vmatpush1.bf16.msra.mxu0 0
    %651 = vmatprep.subr.bf16.mxu0 0
    %652 = vmatpush1.bf16.msra.mxu0 0
    %653 = vmatprep.subr.bf16.mxu0 0
    %654 = vmatpush1.bf16.msra.mxu0 0
    %655 = vmatprep.subr.bf16.mxu0 0
    %656 = vmatpush1.bf16.msra.mxu0 0
    %657 = vmatprep.subr.bf16.mxu0 0
    %658 = vmatpush1.bf16.msra.mxu0 0
    %659 = vmatprep.subr.bf16.mxu0 0
    %660 = vmatpush1.bf16.msra.mxu0 0
    %661 = vmatprep.subr.bf16.mxu0 0
    %662 = vmatpush1.bf16.msra.mxu0 0
    %663 = vmatprep.subr.bf16.mxu0 0
    %664 = vmatpush1.bf16.msra.mxu0 0
    %665 = vmatprep.subr.bf16.mxu0 0
    %666 = vmatpush1.bf16.msra.mxu0 0
    %667 = vmatprep.subr.bf16.mxu0 0
    %668 = vmatpush1.bf16.msra.mxu0 0
    %669 = vmatprep.subr.bf16.mxu0 0
    %670 = vmatpush1.bf16.msra.mxu0 0
    %671 = vmatprep.mubr.bf16.mxu0 0
    %672 = vmatmul.mubr.bf16.gmra.mrb[0].mxu0 %v637
    %v673 = vpop.f32.mrb[0].mxu0
    %v674 = vadd.f32 0.0, %v673
    %v675 = vpop.f32.mrb[0].mxu0
    %v676 = vpop.f32.mrb[0].mxu0
    %v677 = vpop.f32.mrb[0].mxu0
    %678 = vdwg.mxu0
    %v683 = vunpack.c.l.b16 %v502
    %v684 = vunpack.c.l.b16 %v503
    %v685 = vunpack.c.l.b16 %v504
    %v686 = vunpack.c.l.b16 %v505
    %v687 = vpack.c.b16 %v684, %v683
    %v688 = vpack.c.b16 %v686, %v685
    %v692 = vsel %vm394, %v501, 0
    %694 = vmatprep.subr.bf16.mxu0 0
    %695 = vmatpush1.bf16.msra.mxu0 %v687
    %696 = vmatprep.subr.bf16.mxu0 0
    %697 = vmatpush1.bf16.msra.mxu0 %v688
    %698 = vmatprep.subr.bf16.mxu0 0
    %699 = vmatpush1.bf16.msra.mxu0 0
    %700 = vmatprep.subr.bf16.mxu0 0
    %701 = vmatpush1.bf16.msra.mxu0 0
    %702 = vmatprep.subr.bf16.mxu0 0
    %703 = vmatpush1.bf16.msra.mxu0 0
    %704 = vmatprep.subr.bf16.mxu0 0
    %705 = vmatpush1.bf16.msra.mxu0 0
    %706 = vmatprep.subr.bf16.mxu0 0
    %707 = vmatpush1.bf16.msra.mxu0 0
    %708 = vmatprep.subr.bf16.mxu0 0
    %709 = vmatpush1.bf16.msra.mxu0 0
    %710 = vmatprep.subr.bf16.mxu0 0
    %711 = vmatpush1.bf16.msra.mxu0 0
    %712 = vmatprep.subr.bf16.mxu0 0
    %713 = vmatpush1.bf16.msra.mxu0 0
    %714 = vmatprep.subr.bf16.mxu0 0
    %715 = vmatpush1.bf16.msra.mxu0 0
    %716 = vmatprep.subr.bf16.mxu0 0
    %717 = vmatpush1.bf16.msra.mxu0 0
    %718 = vmatprep.subr.bf16.mxu0 0
    %719 = vmatpush1.bf16.msra.mxu0 0
    %720 = vmatprep.subr.bf16.mxu0 0
    %721 = vmatpush1.bf16.msra.mxu0 0
    %722 = vmatprep.subr.bf16.mxu0 0
    %723 = vmatpush1.bf16.msra.mxu0 0
    %724 = vmatprep.subr.bf16.mxu0 0
    %725 = vmatpush1.bf16.msra.mxu0 0
    %726 = vmatprep.mubr.bf16.mxu0 0
    %727 = vmatmul.mubr.bf16.gmra.mrb[0].mxu0 %v692
    %v728 = vpop.f32.mrb[0].mxu0
    %v729 = vadd.f32 %v674, %v728
    %v730 = vpop.f32.mrb[0].mxu0
    %v731 = vpop.f32.mrb[0].mxu0
    %v732 = vpop.f32.mrb[0].mxu0
    %733 = vdwg.mxu0
    %734 = vrot.lane.b32.xlu0 %v391, 64
    %v735 = vpop.permute.xlu0 %734
    %736 = vrot.lane.b32.xlu0 %v392, 64
    %v737 = vpop.permute.xlu0 %736
    %v739 = vsel %vm394, %v735, 0
    %v742 = vsel %vm394, %v737, 0
    %744 = vmatprep.subr.bf16.mxu0 0
    %745 = vmatpush1.bf16.xpose.msra.mxu0 %v742
    %746 = vmatprep.subr.bf16.mxu0 0
    %747 = vmatpush1.bf16.xpose.msra.mxu0 0
    %748 = vmatprep.subr.bf16.mxu0 0
    %749 = vmatpush1.bf16.xpose.msra.mxu0 0
    %750 = vmatprep.subr.bf16.mxu0 0
    %751 = vmatpush1.bf16.xpose.msra.mxu0 0
    %752 = vmatprep.subr.bf16.mxu0 0
    %753 = vmatpush1.bf16.xpose.msra.mxu0 0
    %754 = vmatprep.subr.bf16.mxu0 0
    %755 = vmatpush1.bf16.xpose.msra.mxu0 0
    %756 = vmatprep.subr.bf16.mxu0 0
    %757 = vmatpush1.bf16.xpose.msra.mxu0 0
    %758 = vmatprep.subr.bf16.mxu0 0
    %759 = vmatpush1.bf16.xpose.msra.mxu0 0
    %760 = vmatprep.subr.bf16.mxu0 0
    %761 = vmatpush1.bf16.xpose.msra.mxu0 0
    %762 = vmatprep.subr.bf16.mxu0 0
    %763 = vmatpush1.bf16.xpose.msra.mxu0 0
    %764 = vmatprep.subr.bf16.mxu0 0
    %765 = vmatpush1.bf16.xpose.msra.mxu0 0
    %766 = vmatprep.subr.bf16.mxu0 0
    %767 = vmatpush1.bf16.xpose.msra.mxu0 0
    %768 = vmatprep.subr.bf16.mxu0 0
    %769 = vmatpush1.bf16.xpose.msra.mxu0 0
    %770 = vmatprep.subr.bf16.mxu0 0
    %771 = vmatpush1.bf16.xpose.msra.mxu0 0
    %772 = vmatprep.subr.bf16.mxu0 0
    %773 = vmatpush1.bf16.xpose.msra.mxu0 0
    %774 = vmatprep.subr.bf16.mxu0 0
    %775 = vmatpush1.bf16.xpose.msra.mxu0 0
    %776 = vmatprep.mubr.bf16.mxu0 0
    %777 = vmatmul.mubr.bf16.gmra.mrb[0].mxu0 %v739
    %v778 = vpop.f32.mrb[0].mxu0
    %v779 = vadd.f32 %v390, %v778
    %v780 = vpop.f32.mrb[0].mxu0
    %v781 = vpop.f32.mrb[0].mxu0
    %v782 = vpop.f32.mrb[0].mxu0
    %783 = vdwg.mxu0
    %v784 = vsel %vm441, %v779, -inf
    %785 = vmax.xlane.f32.xlu0 %v784
    %v786 = vpop.xlane.xlu0 %785
    %v787 = vsub.f32 %v779, %v786
    %v788 = vmul.f32 %v787, 1.442695
    %v789 = vpow.pop %v788
    %v790 = vsel %vm441, %v789, 0.0
    %791 = vadd.xlane.f32.xlu0 %v790
    %v792 = vpop.xlane.xlu0 %791
    %v793 = vrcp.pop %v792
    %v794 = vmul.f32 %v789, %v793
    %v795 = vpack.c.bf16 %v794, %v794
    %796 = vrot.lane.b32.xlu0 %v393, 64
    %v797 = vpop.permute.xlu0 %796
    %v799 = vsel %vm441, %v795, 0
    %v802 = vsel %vm457, %v797, 0
    %804 = vmatprep.subr.bf16.mxu0 0
    %805 = vmatpush1.bf16.msra.mxu0 %v802
    %806 = vmatprep.subr.bf16.mxu0 0
    %807 = vmatpush1.bf16.msra.mxu0 0
    %808 = vmatprep.subr.bf16.mxu0 0
    %809 = vmatpush1.bf16.msra.mxu0 0
    %810 = vmatprep.subr.bf16.mxu0 0
    %811 = vmatpush1.bf16.msra.mxu0 0
    %812 = vmatprep.subr.bf16.mxu0 0
    %813 = vmatpush1.bf16.msra.mxu0 0
    %814 = vmatprep.subr.bf16.mxu0 0
    %815 = vmatpush1.bf16.msra.mxu0 0
    %816 = vmatprep.subr.bf16.mxu0 0
    %817 = vmatpush1.bf16.msra.mxu0 0
    %818 = vmatprep.subr.bf16.mxu0 0
    %819 = vmatpush1.bf16.msra.mxu0 0
    %820 = vmatprep.subr.bf16.mxu0 0
    %821 = vmatpush1.bf16.msra.mxu0 0
    %822 = vmatprep.subr.bf16.mxu0 0
    %823 = vmatpush1.bf16.msra.mxu0 0
    %824 = vmatprep.subr.bf16.mxu0 0
    %825 = vmatpush1.bf16.msra.mxu0 0
    %826 = vmatprep.subr.bf16.mxu0 0
    %827 = vmatpush1.bf16.msra.mxu0 0
    %828 = vmatprep.subr.bf16.mxu0 0
    %829 = vmatpush1.bf16.msra.mxu0 0
    %830 = vmatprep.subr.bf16.mxu0 0
    %831 = vmatpush1.bf16.msra.mxu0 0
    %832 = vmatprep.subr.bf16.mxu0 0
    %833 = vmatpush1.bf16.msra.mxu0 0
    %834 = vmatprep.subr.bf16.mxu0 0
    %835 = vmatpush1.bf16.msra.mxu0 0
    %836 = vmatprep.mubr.bf16.mxu0 0
    %837 = vmatmul.mubr.bf16.gmra.mrb[0].mxu0 %v799
    %v838 = vpop.f32.mrb[0].mxu0
    %v839 = vadd.f32 0.0, %v838
    %v840 = vpop.f32.mrb[0].mxu0
    %v841 = vpop.f32.mrb[0].mxu0
    %v842 = vpop.f32.mrb[0].mxu0
    %843 = vdwg.mxu0
    %v844 = vpack.c.bf16 %v839, %v839
    %v845 = vld [vmem:[#allocation7 + $0x20] sm:$0xf]
    %v846 = vld [vmem:[#allocation7 + $0x24] sm:$0xf]
    %v847 = vld [vmem:[#allocation7 + $0x28] sm:$0xf]
    %v848 = vld [vmem:[#allocation7 + $0x2c] sm:$0xf]
    %v853 = vunpack.c.l.b16 %v845
    %v854 = vunpack.c.l.b16 %v846
    %v855 = vunpack.c.l.b16 %v847
    %v856 = vunpack.c.l.b16 %v848
    %v857 = vpack.c.b16 %v854, %v853
    %v858 = vpack.c.b16 %v856, %v855
    %v862 = vsel %vm394, %v844, 0
    %864 = vmatprep.subr.bf16.mxu0 0
    %865 = vmatpush1.bf16.msra.mxu0 %v857
    %866 = vmatprep.subr.bf16.mxu0 0
    %867 = vmatpush1.bf16.msra.mxu0 %v858
    %868 = vmatprep.subr.bf16.mxu0 0
    %869 = vmatpush1.bf16.msra.mxu0 0
    %870 = vmatprep.subr.bf16.mxu0 0
    %871 = vmatpush1.bf16.msra.mxu0 0
    %872 = vmatprep.subr.bf16.mxu0 0
    %873 = vmatpush1.bf16.msra.mxu0 0
    %874 = vmatprep.subr.bf16.mxu0 0
    %875 = vmatpush1.bf16.msra.mxu0 0
    %876 = vmatprep.subr.bf16.mxu0 0
    %877 = vmatpush1.bf16.msra.mxu0 0
    %878 = vmatprep.subr.bf16.mxu0 0
    %879 = vmatpush1.bf16.msra.mxu0 0
    %880 = vmatprep.subr.bf16.mxu0 0
    %881 = vmatpush1.bf16.msra.mxu0 0
    %882 = vmatprep.subr.bf16.mxu0 0
    %883 = vmatpush1.bf16.msra.mxu0 0
    %884 = vmatprep.subr.bf16.mxu0 0
    %885 = vmatpush1.bf16.msra.mxu0 0
    %886 = vmatprep.subr.bf16.mxu0 0
    %887 = vmatpush1.bf16.msra.mxu0 0
    %888 = vmatprep.subr.bf16.mxu0 0
    %889 = vmatpush1.bf16.msra.mxu0 0
    %890 = vmatprep.subr.bf16.mxu0 0
    %891 = vmatpush1.bf16.msra.mxu0 0
    %892 = vmatprep.subr.bf16.mxu0 0
    %893 = vmatpush1.bf16.msra.mxu0 0
    %894 = vmatprep.subr.bf16.mxu0 0
    %895 = vmatpush1.bf16.msra.mxu0 0
    %896 = vmatprep.mubr.bf16.mxu0 0
    %897 = vmatmul.mubr.bf16.gmra.mrb[0].mxu0 %v862
    %v898 = vpop.f32.mrb[0].mxu0
    %v899 = vadd.f32 0.0, %v898
    %v900 = vpop.f32.mrb[0].mxu0
    %v901 = vpop.f32.mrb[0].mxu0
    %v902 = vpop.f32.mrb[0].mxu0
    %903 = vdwg.mxu0
    %v904 = vadd.f32 %v729, %v899
    %905 = vrot.lane.b32.xlu0 %v391, 32
    %v906 = vpop.permute.xlu0 %905
    %907 = vrot.lane.b32.xlu0 %v392, 32
    %v908 = vpop.permute.xlu0 %907
    %v910 = vsel %vm394, %v906, 0
    %v913 = vsel %vm394, %v908, 0
    %915 = vmatprep.subr.bf16.mxu0 0
    %916 = vmatpush1.bf16.xpose.msra.mxu0 %v913
    %917 = vmatprep.subr.bf16.mxu0 0
    %918 = vmatpush1.bf16.xpose.msra.mxu0 0
    %919 = vmatprep.subr.bf16.mxu0 0
    %920 = vmatpush1.bf16.xpose.msra.mxu0 0
    %921 = vmatprep.subr.bf16.mxu0 0
    %922 = vmatpush1.bf16.xpose.msra.mxu0 0
    %923 = vmatprep.subr.bf16.mxu0 0
    %924 = vmatpush1.bf16.xpose.msra.mxu0 0
    %925 = vmatprep.subr.bf16.mxu0 0
    %926 = vmatpush1.bf16.xpose.msra.mxu0 0
    %927 = vmatprep.subr.bf16.mxu0 0
    %928 = vmatpush1.bf16.xpose.msra.mxu0 0
    %929 = vmatprep.subr.bf16.mxu0 0
    %930 = vmatpush1.bf16.xpose.msra.mxu0 0
    %931 = vmatprep.subr.bf16.mxu0 0
    %932 = vmatpush1.bf16.xpose.msra.mxu0 0
    %933 = vmatprep.subr.bf16.mxu0 0
    %934 = vmatpush1.bf16.xpose.msra.mxu0 0
    %935 = vmatprep.subr.bf16.mxu0 0
    %936 = vmatpush1.bf16.xpose.msra.mxu0 0
    %937 = vmatprep.subr.bf16.mxu0 0
    %938 = vmatpush1.bf16.xpose.msra.mxu0 0
    %939 = vmatprep.subr.bf16.mxu0 0
    %940 = vmatpush1.bf16.xpose.msra.mxu0 0
    %941 = vmatprep.subr.bf16.mxu0 0
    %942 = vmatpush1.bf16.xpose.msra.mxu0 0
    %943 = vmatprep.subr.bf16.mxu0 0
    %944 = vmatpush1.bf16.xpose.msra.mxu0 0
    %945 = vmatprep.subr.bf16.mxu0 0
    %946 = vmatpush1.bf16.xpose.msra.mxu0 0
    %947 = vmatprep.mubr.bf16.mxu0 0
    %948 = vmatmul.mubr.bf16.gmra.mrb[0].mxu0 %v910
    %v949 = vpop.f32.mrb[0].mxu0
    %v950 = vadd.f32 %v390, %v949
    %v951 = vpop.f32.mrb[0].mxu0
    %v952 = vpop.f32.mrb[0].mxu0
    %v953 = vpop.f32.mrb[0].mxu0
    %954 = vdwg.mxu0
    %v955 = vsel %vm441, %v950, -inf
    %956 = vmax.xlane.f32.xlu0 %v955
    %v957 = vpop.xlane.xlu0 %956
    %v958 = vsub.f32 %v950, %v957
    %v959 = vmul.f32 %v958, 1.442695
    %v960 = vpow.pop %v959
    %v961 = vsel %vm441, %v960, 0.0
    %962 = vadd.xlane.f32.xlu0 %v961
    %v963 = vpop.xlane.xlu0 %962
    %v964 = vrcp.pop %v963
    %v965 = vmul.f32 %v960, %v964
    %v966 = vpack.c.bf16 %v965, %v965
    %967 = vrot.lane.b32.xlu0 %v393, 32
    %v968 = vpop.permute.xlu0 %967
    %v970 = vsel %vm441, %v966, 0
    %v973 = vsel %vm457, %v968, 0
    %975 = vmatprep.subr.bf16.mxu0 0
    %976 = vmatpush1.bf16.msra.mxu0 %v973
    %977 = vmatprep.subr.bf16.mxu0 0
    %978 = vmatpush1.bf16.msra.mxu0 0
    %979 = vmatprep.subr.bf16.mxu0 0
    %980 = vmatpush1.bf16.msra.mxu0 0
    %981 = vmatprep.subr.bf16.mxu0 0
    %982 = vmatpush1.bf16.msra.mxu0 0
    %983 = vmatprep.subr.bf16.mxu0 0
    %984 = vmatpush1.bf16.msra.mxu0 0
    %985 = vmatprep.subr.bf16.mxu0 0
    %986 = vmatpush1.bf16.msra.mxu0 0
    %987 = vmatprep.subr.bf16.mxu0 0
    %988 = vmatpush1.bf16.msra.mxu0 0
    %989 = vmatprep.subr.bf16.mxu0 0
    %990 = vmatpush1.bf16.msra.mxu0 0
    %991 = vmatprep.subr.bf16.mxu0 0
    %992 = vmatpush1.bf16.msra.mxu0 0
    %993 = vmatprep.subr.bf16.mxu0 0
    %994 = vmatpush1.bf16.msra.mxu0 0
    %995 = vmatprep.subr.bf16.mxu0 0
    %996 = vmatpush1.bf16.msra.mxu0 0
    %997 = vmatprep.subr.bf16.mxu0 0
    %998 = vmatpush1.bf16.msra.mxu0 0
    %999 = vmatprep.subr.bf16.mxu0 0
    %1000 = vmatpush1.bf16.msra.mxu0 0
    %1001 = vmatprep.subr.bf16.mxu0 0
    %1002 = vmatpush1.bf16.msra.mxu0 0
    %1003 = vmatprep.subr.bf16.mxu0 0
    %1004 = vmatpush1.bf16.msra.mxu0 0
    %1005 = vmatprep.subr.bf16.mxu0 0
    %1006 = vmatpush1.bf16.msra.mxu0 0
    %1007 = vmatprep.mubr.bf16.mxu0 0
    %1008 = vmatmul.mubr.bf16.gmra.mrb[0].mxu0 %v970
    %v1009 = vpop.f32.mrb[0].mxu0
    %v1010 = vadd.f32 0.0, %v1009
    %v1011 = vpop.f32.mrb[0].mxu0
    %v1012 = vpop.f32.mrb[0].mxu0
    %v1013 = vpop.f32.mrb[0].mxu0
    %1014 = vdwg.mxu0
    %v1015 = vpack.c.bf16 %v1010, %v1010
    %v1016 = vld [vmem:[#allocation7 + $0x30] sm:$0xf]
    %v1017 = vld [vmem:[#allocation7 + $0x34] sm:$0xf]
    %v1018 = vld [vmem:[#allocation7 + $0x38] sm:$0xf]
    %v1019 = vld [vmem:[#allocation7 + $0x3c] sm:$0xf]
    %v1024 = vunpack.c.l.b16 %v1016
    %v1025 = vunpack.c.l.b16 %v1017
    %v1026 = vunpack.c.l.b16 %v1018
    %v1027 = vunpack.c.l.b16 %v1019
    %v1028 = vpack.c.b16 %v1025, %v1024
    %v1029 = vpack.c.b16 %v1027, %v1026
    %v1033 = vsel %vm394, %v1015, 0
    %1035 = vmatprep.subr.bf16.mxu0 0
    %1036 = vmatpush1.bf16.msra.mxu0 %v1028
    %1037 = vmatprep.subr.bf16.mxu0 0
    %1038 = vmatpush1.bf16.msra.mxu0 %v1029
    %1039 = vmatprep.subr.bf16.mxu0 0
    %1040 = vmatpush1.bf16.msra.mxu0 0
    %1041 = vmatprep.subr.bf16.mxu0 0
    %1042 = vmatpush1.bf16.msra.mxu0 0
    %1043 = vmatprep.subr.bf16.mxu0 0
    %1044 = vmatpush1.bf16.msra.mxu0 0
    %1045 = vmatprep.subr.bf16.mxu0 0
    %1046 = vmatpush1.bf16.msra.mxu0 0
    %1047 = vmatprep.subr.bf16.mxu0 0
    %1048 = vmatpush1.bf16.msra.mxu0 0
    %1049 = vmatprep.subr.bf16.mxu0 0
    %1050 = vmatpush1.bf16.msra.mxu0 0
    %1051 = vmatprep.subr.bf16.mxu0 0
    %1052 = vmatpush1.bf16.msra.mxu0 0
    %1053 = vmatprep.subr.bf16.mxu0 0
    %1054 = vmatpush1.bf16.msra.mxu0 0
    %1055 = vmatprep.subr.bf16.mxu0 0
    %1056 = vmatpush1.bf16.msra.mxu0 0
    %1057 = vmatprep.subr.bf16.mxu0 0
    %1058 = vmatpush1.bf16.msra.mxu0 0
    %1059 = vmatprep.subr.bf16.mxu0 0
    %1060 = vmatpush1.bf16.msra.mxu0 0
    %1061 = vmatprep.subr.bf16.mxu0 0
    %1062 = vmatpush1.bf16.msra.mxu0 0
    %1063 = vmatprep.subr.bf16.mxu0 0
    %1064 = vmatpush1.bf16.msra.mxu0 0
    %1065 = vmatprep.subr.bf16.mxu0 0
    %1066 = vmatpush1.bf16.msra.mxu0 0
    %1067 = vmatprep.mubr.bf16.mxu0 0
    %1068 = vmatmul.mubr.bf16.gmra.mrb[0].mxu0 %v1033
    %v1069 = vpop.f32.mrb[0].mxu0
    %v1070 = vadd.f32 0.0, %v1069
    %v1071 = vpop.f32.mrb[0].mxu0
    %v1072 = vpop.f32.mrb[0].mxu0
    %v1073 = vpop.f32.mrb[0].mxu0
    %1074 = vdwg.mxu0
    %v1075 = vadd.f32 %v904, %v1070
    %v1076 = vpack.c.bf16 %v340, %v340
    %v1077 = vpack.c.bf16 %v342, %v342
    %v1078 = vpack.c.bf16 %v382, %v382
    %v1080 = vsel %vm394, %v1076, 0
    %v1083 = vsel %vm394, %v1077, 0
    %1085 = vmatprep.subr.bf16.mxu0 0
    %1086 = vmatpush1.bf16.xpose.msra.mxu0 %v1083
    %1087 = vmatprep.subr.bf16.mxu0 0
    %1088 = vmatpush1.bf16.xpose.msra.mxu0 0
    %1089 = vmatprep.subr.bf16.mxu0 0
    %1090 = vmatpush1.bf16.xpose.msra.mxu0 0
    %1091 = vmatprep.subr.bf16.mxu0 0
    %1092 = vmatpush1.bf16.xpose.msra.mxu0 0
    %1093 = vmatprep.subr.bf16.mxu0 0
    %1094 = vmatpush1.bf16.xpose.msra.mxu0 0
    %1095 = vmatprep.subr.bf16.mxu0 0
    %1096 = vmatpush1.bf16.xpose.msra.mxu0 0
    %1097 = vmatprep.subr.bf16.mxu0 0
    %1098 = vmatpush1.bf16.xpose.msra.mxu0 0
    %1099 = vmatprep.subr.bf16.mxu0 0
    %1100 = vmatpush1.bf16.xpose.msra.mxu0 0
    %1101 = vmatprep.subr.bf16.mxu0 0
    %1102 = vmatpush1.bf16.xpose.msra.mxu0 0
    %1103 = vmatprep.subr.bf16.mxu0 0
    %1104 = vmatpush1.bf16.xpose.msra.mxu0 0
    %1105 = vmatprep.subr.bf16.mxu0 0
    %1106 = vmatpush1.bf16.xpose.msra.mxu0 0
    %1107 = vmatprep.subr.bf16.mxu0 0
    %1108 = vmatpush1.bf16.xpose.msra.mxu0 0
    %1109 = vmatprep.subr.bf16.mxu0 0
    %1110 = vmatpush1.bf16.xpose.msra.mxu0 0
    %1111 = vmatprep.subr.bf16.mxu0 0
    %1112 = vmatpush1.bf16.xpose.msra.mxu0 0
    %1113 = vmatprep.subr.bf16.mxu0 0
    %1114 = vmatpush1.bf16.xpose.msra.mxu0 0
    %1115 = vmatprep.subr.bf16.mxu0 0
    %1116 = vmatpush1.bf16.xpose.msra.mxu0 0
    %1117 = vmatprep.mubr.bf16.mxu0 0
    %1118 = vmatmul.mubr.bf16.gmra.mrb[0].mxu0 %v1080
    %v1119 = vpop.f32.mrb[0].mxu0
    %v1120 = vadd.f32 %v390, %v1119
    %v1121 = vpop.f32.mrb[0].mxu0
    %v1122 = vpop.f32.mrb[0].mxu0
    %v1123 = vpop.f32.mrb[0].mxu0
    %1124 = vdwg.mxu0
    %v1125 = vsel %vm441, %v1120, -inf
    %1126 = vmax.xlane.f32.xlu0 %v1125
    %v1127 = vpop.xlane.xlu0 %1126
    %v1128 = vsub.f32 %v1120, %v1127
    %v1129 = vmul.f32 %v1128, 1.442695
    %v1130 = vpow.pop %v1129
    %v1131 = vsel %vm441, %v1130, 0.0
    %1132 = vadd.xlane.f32.xlu0 %v1131
    %v1133 = vpop.xlane.xlu0 %1132
    %v1134 = vrcp.pop %v1133
    %v1135 = vmul.f32 %v1130, %v1134
    %v1136 = vpack.c.bf16 %v1135, %v1135
    %v1138 = vsel %vm441, %v1136, 0
    %v1141 = vsel %vm457, %v1078, 0
    %1143 = vmatprep.subr.bf16.mxu0 0
    %1144 = vmatpush1.bf16.msra.mxu0 %v1141
    %1145 = vmatprep.subr.bf16.mxu0 0
    %1146 = vmatpush1.bf16.msra.mxu0 0
    %1147 = vmatprep.subr.bf16.mxu0 0
    %1148 = vmatpush1.bf16.msra.mxu0 0
    %1149 = vmatprep.subr.bf16.mxu0 0
    %1150 = vmatpush1.bf16.msra.mxu0 0
    %1151 = vmatprep.subr.bf16.mxu0 0
    %1152 = vmatpush1.bf16.msra.mxu0 0
    %1153 = vmatprep.subr.bf16.mxu0 0
    %1154 = vmatpush1.bf16.msra.mxu0 0
    %1155 = vmatprep.subr.bf16.mxu0 0
    %1156 = vmatpush1.bf16.msra.mxu0 0
    %1157 = vmatprep.subr.bf16.mxu0 0
    %1158 = vmatpush1.bf16.msra.mxu0 0
    %1159 = vmatprep.subr.bf16.mxu0 0
    %1160 = vmatpush1.bf16.msra.mxu0 0
    %1161 = vmatprep.subr.bf16.mxu0 0
    %1162 = vmatpush1.bf16.msra.mxu0 0
    %1163 = vmatprep.subr.bf16.mxu0 0
    %1164 = vmatpush1.bf16.msra.mxu0 0
    %1165 = vmatprep.subr.bf16.mxu0 0
    %1166 = vmatpush1.bf16.msra.mxu0 0
    %1167 = vmatprep.subr.bf16.mxu0 0
    %1168 = vmatpush1.bf16.msra.mxu0 0
    %1169 = vmatprep.subr.bf16.mxu0 0
    %1170 = vmatpush1.bf16.msra.mxu0 0
    %1171 = vmatprep.subr.bf16.mxu0 0
    %1172 = vmatpush1.bf16.msra.mxu0 0
    %1173 = vmatprep.subr.bf16.mxu0 0
    %1174 = vmatpush1.bf16.msra.mxu0 0
    %1175 = vmatprep.mubr.bf16.mxu0 0
    %1176 = vmatmul.mubr.bf16.gmra.mrb[0].mxu0 %v1138
    %v1177 = vpop.f32.mrb[0].mxu0
    %v1178 = vadd.f32 0.0, %v1177
    %v1179 = vpop.f32.mrb[0].mxu0
    %v1180 = vpop.f32.mrb[0].mxu0
    %v1181 = vpop.f32.mrb[0].mxu0
    %1182 = vdwg.mxu0
    %v1183 = vpack.c.bf16 %v1178, %v1178
    %1185 = vrot.lane.b32.xlu0 %v1076, 96
    %v1186 = vpop.permute.xlu0 %1185
    %1188 = vrot.lane.b32.xlu0 %v1077, 96
    %v1189 = vpop.permute.xlu0 %1188
    %v1191 = vsel %vm394, %v1186, 0
    %v1194 = vsel %vm394, %v1189, 0
    %1196 = vmatprep.subr.bf16.mxu0 0
    %1197 = vmatpush1.bf16.xpose.msra.mxu0 %v1194
    %1198 = vmatprep.subr.bf16.mxu0 0
    %1199 = vmatpush1.bf16.xpose.msra.mxu0 0
    %1200 = vmatprep.subr.bf16.mxu0 0
    %1201 = vmatpush1.bf16.xpose.msra.mxu0 0
    %1202 = vmatprep.subr.bf16.mxu0 0
    %1203 = vmatpush1.bf16.xpose.msra.mxu0 0
    %1204 = vmatprep.subr.bf16.mxu0 0
    %1205 = vmatpush1.bf16.xpose.msra.mxu0 0
    %1206 = vmatprep.subr.bf16.mxu0 0
    %1207 = vmatpush1.bf16.xpose.msra.mxu0 0
    %1208 = vmatprep.subr.bf16.mxu0 0
    %1209 = vmatpush1.bf16.xpose.msra.mxu0 0
    %1210 = vmatprep.subr.bf16.mxu0 0
    %1211 = vmatpush1.bf16.xpose.msra.mxu0 0
    %1212 = vmatprep.subr.bf16.mxu0 0
    %1213 = vmatpush1.bf16.xpose.msra.mxu0 0
    %1214 = vmatprep.subr.bf16.mxu0 0
    %1215 = vmatpush1.bf16.xpose.msra.mxu0 0
    %1216 = vmatprep.subr.bf16.mxu0 0
    %1217 = vmatpush1.bf16.xpose.msra.mxu0 0
    %1218 = vmatprep.subr.bf16.mxu0 0
    %1219 = vmatpush1.bf16.xpose.msra.mxu0 0
    %1220 = vmatprep.subr.bf16.mxu0 0
    %1221 = vmatpush1.bf16.xpose.msra.mxu0 0
    %1222 = vmatprep.subr.bf16.mxu0 0
    %1223 = vmatpush1.bf16.xpose.msra.mxu0 0
    %1224 = vmatprep.subr.bf16.mxu0 0
    %1225 = vmatpush1.bf16.xpose.msra.mxu0 0
    %1226 = vmatprep.subr.bf16.mxu0 0
    %1227 = vmatpush1.bf16.xpose.msra.mxu0 0
    %1228 = vmatprep.mubr.bf16.mxu0 0
    %1229 = vmatmul.mubr.bf16.gmra.mrb[0].mxu0 %v1191
    %v1230 = vpop.f32.mrb[0].mxu0
    %v1231 = vadd.f32 %v390, %v1230
    %v1232 = vpop.f32.mrb[0].mxu0
    %v1233 = vpop.f32.mrb[0].mxu0
    %v1234 = vpop.f32.mrb[0].mxu0
    %1235 = vdwg.mxu0
    %v1236 = vsel %vm441, %v1231, -inf
    %1237 = vmax.xlane.f32.xlu0 %v1236
    %v1238 = vpop.xlane.xlu0 %1237
    %v1239 = vsub.f32 %v1231, %v1238
    %v1240 = vmul.f32 %v1239, 1.442695
    %v1241 = vpow.pop %v1240
    %v1242 = vsel %vm441, %v1241, 0.0
    %1243 = vadd.xlane.f32.xlu0 %v1242
    %v1244 = vpop.xlane.xlu0 %1243
    %v1245 = vrcp.pop %v1244
    %v1246 = vmul.f32 %v1241, %v1245
    %v1247 = vpack.c.bf16 %v1246, %v1246
    %1249 = vrot.lane.b32.xlu0 %v1078, 96
    %v1250 = vpop.permute.xlu0 %1249
    %v1252 = vsel %vm441, %v1247, 0
    %v1255 = vsel %vm457, %v1250, 0
    %1257 = vmatprep.subr.bf16.mxu0 0
    %1258 = vmatpush1.bf16.msra.mxu0 %v1255
    %1259 = vmatprep.subr.bf16.mxu0 0
    %1260 = vmatpush1.bf16.msra.mxu0 0
    %1261 = vmatprep.subr.bf16.mxu0 0
    %1262 = vmatpush1.bf16.msra.mxu0 0
    %1263 = vmatprep.subr.bf16.mxu0 0
    %1264 = vmatpush1.bf16.msra.mxu0 0
    %1265 = vmatprep.subr.bf16.mxu0 0
    %1266 = vmatpush1.bf16.msra.mxu0 0
    %1267 = vmatprep.subr.bf16.mxu0 0
    %1268 = vmatpush1.bf16.msra.mxu0 0
    %1269 = vmatprep.subr.bf16.mxu0 0
    %1270 = vmatpush1.bf16.msra.mxu0 0
    %1271 = vmatprep.subr.bf16.mxu0 0
    %1272 = vmatpush1.bf16.msra.mxu0 0
    %1273 = vmatprep.subr.bf16.mxu0 0
    %1274 = vmatpush1.bf16.msra.mxu0 0
    %1275 = vmatprep.subr.bf16.mxu0 0
    %1276 = vmatpush1.bf16.msra.mxu0 0
    %1277 = vmatprep.subr.bf16.mxu0 0
    %1278 = vmatpush1.bf16.msra.mxu0 0
    %1279 = vmatprep.subr.bf16.mxu0 0
    %1280 = vmatpush1.bf16.msra.mxu0 0
    %1281 = vmatprep.subr.bf16.mxu0 0
    %1282 = vmatpush1.bf16.msra.mxu0 0
    %1283 = vmatprep.subr.bf16.mxu0 0
    %1284 = vmatpush1.bf16.msra.mxu0 0
    %1285 = vmatprep.subr.bf16.mxu0 0
    %1286 = vmatpush1.bf16.msra.mxu0 0
    %1287 = vmatprep.subr.bf16.mxu0 0
    %1288 = vmatpush1.bf16.msra.mxu0 0
    %1289 = vmatprep.mubr.bf16.mxu0 0
    %1290 = vmatmul.mubr.bf16.gmra.mrb[0].mxu0 %v1252
    %v1291 = vpop.f32.mrb[0].mxu0
    %v1292 = vadd.f32 0.0, %v1291
    %v1293 = vpop.f32.mrb[0].mxu0
    %v1294 = vpop.f32.mrb[0].mxu0
    %v1295 = vpop.f32.mrb[0].mxu0
    %1296 = vdwg.mxu0
    %v1297 = vpack.c.bf16 %v1292, %v1292
    %v1299 = vsel %vm394, %v1297, 0
    %1301 = vmatprep.subr.bf16.mxu0 0
    %1302 = vmatpush1.bf16.msra.mxu0 %v632
    %1303 = vmatprep.subr.bf16.mxu0 0
    %1304 = vmatpush1.bf16.msra.mxu0 %v633
    %1305 = vmatprep.subr.bf16.mxu0 0
    %1306 = vmatpush1.bf16.msra.mxu0 0
    %1307 = vmatprep.subr.bf16.mxu0 0
    %1308 = vmatpush1.bf16.msra.mxu0 0
    %1309 = vmatprep.subr.bf16.mxu0 0
    %1310 = vmatpush1.bf16.msra.mxu0 0
    %1311 = vmatprep.subr.bf16.mxu0 0
    %1312 = vmatpush1.bf16.msra.mxu0 0
    %1313 = vmatprep.subr.bf16.mxu0 0
    %1314 = vmatpush1.bf16.msra.mxu0 0
    %1315 = vmatprep.subr.bf16.mxu0 0
    %1316 = vmatpush1.bf16.msra.mxu0 0
    %1317 = vmatprep.subr.bf16.mxu0 0
    %1318 = vmatpush1.bf16.msra.mxu0 0
    %1319 = vmatprep.subr.bf16.mxu0 0
    %1320 = vmatpush1.bf16.msra.mxu0 0
    %1321 = vmatprep.subr.bf16.mxu0 0
    %1322 = vmatpush1.bf16.msra.mxu0 0
    %1323 = vmatprep.subr.bf16.mxu0 0
    %1324 = vmatpush1.bf16.msra.mxu0 0
    %1325 = vmatprep.subr.bf16.mxu0 0
    %1326 = vmatpush1.bf16.msra.mxu0 0
    %1327 = vmatprep.subr.bf16.mxu0 0
    %1328 = vmatpush1.bf16.msra.mxu0 0
    %1329 = vmatprep.subr.bf16.mxu0 0
    %1330 = vmatpush1.bf16.msra.mxu0 0
    %1331 = vmatprep.subr.bf16.mxu0 0
    %1332 = vmatpush1.bf16.msra.mxu0 0
    %1333 = vmatprep.mubr.bf16.mxu0 0
    %1334 = vmatmul.mubr.bf16.gmra.mrb[0].mxu0 %v1299
    %v1335 = vpop.f32.mrb[0].mxu0
    %v1336 = vadd.f32 0.0, %v1335
    %v1337 = vpop.f32.mrb[0].mxu0
    %v1338 = vpop.f32.mrb[0].mxu0
    %v1339 = vpop.f32.mrb[0].mxu0
    %1340 = vdwg.mxu0
    %v1342 = vsel %vm394, %v1183, 0
    %1344 = vmatprep.subr.bf16.mxu0 0
    %1345 = vmatpush1.bf16.msra.mxu0 %v687
    %1346 = vmatprep.subr.bf16.mxu0 0
    %1347 = vmatpush1.bf16.msra.mxu0 %v688
    %1348 = vmatprep.subr.bf16.mxu0 0
    %1349 = vmatpush1.bf16.msra.mxu0 0
    %1350 = vmatprep.subr.bf16.mxu0 0
    %1351 = vmatpush1.bf16.msra.mxu0 0
    %1352 = vmatprep.subr.bf16.mxu0 0
    %1353 = vmatpush1.bf16.msra.mxu0 0
    %1354 = vmatprep.subr.bf16.mxu0 0
    %1355 = vmatpush1.bf16.msra.mxu0 0
    %1356 = vmatprep.subr.bf16.mxu0 0
    %1357 = vmatpush1.bf16.msra.mxu0 0
    %1358 = vmatprep.subr.bf16.mxu0 0
    %1359 = vmatpush1.bf16.msra.mxu0 0
    %1360 = vmatprep.subr.bf16.mxu0 0
    %1361 = vmatpush1.bf16.msra.mxu0 0
    %1362 = vmatprep.subr.bf16.mxu0 0
    %1363 = vmatpush1.bf16.msra.mxu0 0
    %1364 = vmatprep.subr.bf16.mxu0 0
    %1365 = vmatpush1.bf16.msra.mxu0 0
    %1366 = vmatprep.subr.bf16.mxu0 0
    %1367 = vmatpush1.bf16.msra.mxu0 0
    %1368 = vmatprep.subr.bf16.mxu0 0
    %1369 = vmatpush1.bf16.msra.mxu0 0
    %1370 = vmatprep.subr.bf16.mxu0 0
    %1371 = vmatpush1.bf16.msra.mxu0 0
    %1372 = vmatprep.subr.bf16.mxu0 0
    %1373 = vmatpush1.bf16.msra.mxu0 0
    %1374 = vmatprep.subr.bf16.mxu0 0
    %1375 = vmatpush1.bf16.msra.mxu0 0
    %1376 = vmatprep.mubr.bf16.mxu0 0
    %1377 = vmatmul.mubr.bf16.gmra.mrb[0].mxu0 %v1342
    %v1378 = vpop.f32.mrb[0].mxu0
    %v1379 = vadd.f32 %v1336, %v1378
    %v1380 = vpop.f32.mrb[0].mxu0
    %v1381 = vpop.f32.mrb[0].mxu0
    %v1382 = vpop.f32.mrb[0].mxu0
    %1383 = vdwg.mxu0
    %1384 = vrot.lane.b32.xlu0 %v1076, 64
    %v1385 = vpop.permute.xlu0 %1384
    %1386 = vrot.lane.b32.xlu0 %v1077, 64
    %v1387 = vpop.permute.xlu0 %1386
    %v1389 = vsel %vm394, %v1385, 0
    %v1392 = vsel %vm394, %v1387, 0
    %1394 = vmatprep.subr.bf16.mxu0 0
    %1395 = vmatpush1.bf16.xpose.msra.mxu0 %v1392
    %1396 = vmatprep.subr.bf16.mxu0 0
    %1397 = vmatpush1.bf16.xpose.msra.mxu0 0
    %1398 = vmatprep.subr.bf16.mxu0 0
    %1399 = vmatpush1.bf16.xpose.msra.mxu0 0
    %1400 = vmatprep.subr.bf16.mxu0 0
    %1401 = vmatpush1.bf16.xpose.msra.mxu0 0
    %1402 = vmatprep.subr.bf16.mxu0 0
    %1403 = vmatpush1.bf16.xpose.msra.mxu0 0
    %1404 = vmatprep.subr.bf16.mxu0 0
    %1405 = vmatpush1.bf16.xpose.msra.mxu0 0
    %1406 = vmatprep.subr.bf16.mxu0 0
    %1407 = vmatpush1.bf16.xpose.msra.mxu0 0
    %1408 = vmatprep.subr.bf16.mxu0 0
    %1409 = vmatpush1.bf16.xpose.msra.mxu0 0
    %1410 = vmatprep.subr.bf16.mxu0 0
    %1411 = vmatpush1.bf16.xpose.msra.mxu0 0
    %1412 = vmatprep.subr.bf16.mxu0 0
    %1413 = vmatpush1.bf16.xpose.msra.mxu0 0
    %1414 = vmatprep.subr.bf16.mxu0 0
    %1415 = vmatpush1.bf16.xpose.msra.mxu0 0
    %1416 = vmatprep.subr.bf16.mxu0 0
    %1417 = vmatpush1.bf16.xpose.msra.mxu0 0
    %1418 = vmatprep.subr.bf16.mxu0 0
    %1419 = vmatpush1.bf16.xpose.msra.mxu0 0
    %1420 = vmatprep.subr.bf16.mxu0 0
    %1421 = vmatpush1.bf16.xpose.msra.mxu0 0
    %1422 = vmatprep.subr.bf16.mxu0 0
    %1423 = vmatpush1.bf16.xpose.msra.mxu0 0
    %1424 = vmatprep.subr.bf16.mxu0 0
    %1425 = vmatpush1.bf16.xpose.msra.mxu0 0
    %1426 = vmatprep.mubr.bf16.mxu0 0
    %1427 = vmatmul.mubr.bf16.gmra.mrb[0].mxu0 %v1389
    %v1428 = vpop.f32.mrb[0].mxu0
    %v1429 = vadd.f32 %v390, %v1428
    %v1430 = vpop.f32.mrb[0].mxu0
    %v1431 = vpop.f32.mrb[0].mxu0
    %v1432 = vpop.f32.mrb[0].mxu0
    %1433 = vdwg.mxu0
    %v1434 = vsel %vm441, %v1429, -inf
    %1435 = vmax.xlane.f32.xlu0 %v1434
    %v1436 = vpop.xlane.xlu0 %1435
    %v1437 = vsub.f32 %v1429, %v1436
    %v1438 = vmul.f32 %v1437, 1.442695
    %v1439 = vpow.pop %v1438
    %v1440 = vsel %vm441, %v1439, 0.0
    %1441 = vadd.xlane.f32.xlu0 %v1440
    %v1442 = vpop.xlane.xlu0 %1441
    %v1443 = vrcp.pop %v1442
    %v1444 = vmul.f32 %v1439, %v1443
    %v1445 = vpack.c.bf16 %v1444, %v1444
    %1446 = vrot.lane.b32.xlu0 %v1078, 64
    %v1447 = vpop.permute.xlu0 %1446
    %v1449 = vsel %vm441, %v1445, 0
    %v1452 = vsel %vm457, %v1447, 0
    %1454 = vmatprep.subr.bf16.mxu0 0
    %1455 = vmatpush1.bf16.msra.mxu0 %v1452
    %1456 = vmatprep.subr.bf16.mxu0 0
    %1457 = vmatpush1.bf16.msra.mxu0 0
    %1458 = vmatprep.subr.bf16.mxu0 0
    %1459 = vmatpush1.bf16.msra.mxu0 0
    %1460 = vmatprep.subr.bf16.mxu0 0
    %1461 = vmatpush1.bf16.msra.mxu0 0
    %1462 = vmatprep.subr.bf16.mxu0 0
    %1463 = vmatpush1.bf16.msra.mxu0 0
    %1464 = vmatprep.subr.bf16.mxu0 0
    %1465 = vmatpush1.bf16.msra.mxu0 0
    %1466 = vmatprep.subr.bf16.mxu0 0
    %1467 = vmatpush1.bf16.msra.mxu0 0
    %1468 = vmatprep.subr.bf16.mxu0 0
    %1469 = vmatpush1.bf16.msra.mxu0 0
    %1470 = vmatprep.subr.bf16.mxu0 0
    %1471 = vmatpush1.bf16.msra.mxu0 0
    %1472 = vmatprep.subr.bf16.mxu0 0
    %1473 = vmatpush1.bf16.msra.mxu0 0
    %1474 = vmatprep.subr.bf16.mxu0 0
    %1475 = vmatpush1.bf16.msra.mxu0 0
    %1476 = vmatprep.subr.bf16.mxu0 0
    %1477 = vmatpush1.bf16.msra.mxu0 0
    %1478 = vmatprep.subr.bf16.mxu0 0
    %1479 = vmatpush1.bf16.msra.mxu0 0
    %1480 = vmatprep.subr.bf16.mxu0 0
    %1481 = vmatpush1.bf16.msra.mxu0 0
    %1482 = vmatprep.subr.bf16.mxu0 0
    %1483 = vmatpush1.bf16.msra.mxu0 0
    %1484 = vmatprep.subr.bf16.mxu0 0
    %1485 = vmatpush1.bf16.msra.mxu0 0
    %1486 = vmatprep.mubr.bf16.mxu0 0
    %1487 = vmatmul.mubr.bf16.gmra.mrb[0].mxu0 %v1449
    %v1488 = vpop.f32.mrb[0].mxu0
    %v1489 = vadd.f32 0.0, %v1488
    %v1490 = vpop.f32.mrb[0].mxu0
    %v1491 = vpop.f32.mrb[0].mxu0
    %v1492 = vpop.f32.mrb[0].mxu0
    %1493 = vdwg.mxu0
    %v1494 = vpack.c.bf16 %v1489, %v1489
    %v1496 = vsel %vm394, %v1494, 0
    %1498 = vmatprep.subr.bf16.mxu0 0
    %1499 = vmatpush1.bf16.msra.mxu0 %v857
    %1500 = vmatprep.subr.bf16.mxu0 0
    %1501 = vmatpush1.bf16.msra.mxu0 %v858
    %1502 = vmatprep.subr.bf16.mxu0 0
    %1503 = vmatpush1.bf16.msra.mxu0 0
    %1504 = vmatprep.subr.bf16.mxu0 0
    %1505 = vmatpush1.bf16.msra.mxu0 0
    %1506 = vmatprep.subr.bf16.mxu0 0
    %1507 = vmatpush1.bf16.msra.mxu0 0
    %1508 = vmatprep.subr.bf16.mxu0 0
    %1509 = vmatpush1.bf16.msra.mxu0 0
    %1510 = vmatprep.subr.bf16.mxu0 0
    %1511 = vmatpush1.bf16.msra.mxu0 0
    %1512 = vmatprep.subr.bf16.mxu0 0
    %1513 = vmatpush1.bf16.msra.mxu0 0
    %1514 = vmatprep.subr.bf16.mxu0 0
    %1515 = vmatpush1.bf16.msra.mxu0 0
    %1516 = vmatprep.subr.bf16.mxu0 0
    %1517 = vmatpush1.bf16.msra.mxu0 0
    %1518 = vmatprep.subr.bf16.mxu0 0
    %1519 = vmatpush1.bf16.msra.mxu0 0
    %1520 = vmatprep.subr.bf16.mxu0 0
    %1521 = vmatpush1.bf16.msra.mxu0 0
    %1522 = vmatprep.subr.bf16.mxu0 0
    %1523 = vmatpush1.bf16.msra.mxu0 0
    %1524 = vmatprep.subr.bf16.mxu0 0
    %1525 = vmatpush1.bf16.msra.mxu0 0
    %1526 = vmatprep.subr.bf16.mxu0 0
    %1527 = vmatpush1.bf16.msra.mxu0 0
    %1528 = vmatprep.subr.bf16.mxu0 0
    %1529 = vmatpush1.bf16.msra.mxu0 0
    %1530 = vmatprep.mubr.bf16.mxu0 0
    %1531 = vmatmul.mubr.bf16.gmra.mrb[0].mxu0 %v1496
    %v1532 = vpop.f32.mrb[0].mxu0
    %v1533 = vadd.f32 0.0, %v1532
    %v1534 = vpop.f32.mrb[0].mxu0
    %v1535 = vpop.f32.mrb[0].mxu0
    %v1536 = vpop.f32.mrb[0].mxu0
    %1537 = vdwg.mxu0
    %v1538 = vadd.f32 %v1379, %v1533
    %1539 = vrot.lane.b32.xlu0 %v1076, 32
    %v1540 = vpop.permute.xlu0 %1539
    %1541 = vrot.lane.b32.xlu0 %v1077, 32
    %v1542 = vpop.permute.xlu0 %1541
    %v1544 = vsel %vm394, %v1540, 0
    %v1547 = vsel %vm394, %v1542, 0
    %1549 = vmatprep.subr.bf16.mxu0 0
    %1550 = vmatpush1.bf16.xpose.msra.mxu0 %v1547
    %1551 = vmatprep.subr.bf16.mxu0 0
    %1552 = vmatpush1.bf16.xpose.msra.mxu0 0
    %1553 = vmatprep.subr.bf16.mxu0 0
    %1554 = vmatpush1.bf16.xpose.msra.mxu0 0
    %1555 = vmatprep.subr.bf16.mxu0 0
    %1556 = vmatpush1.bf16.xpose.msra.mxu0 0
    %1557 = vmatprep.subr.bf16.mxu0 0
    %1558 = vmatpush1.bf16.xpose.msra.mxu0 0
    %1559 = vmatprep.subr.bf16.mxu0 0
    %1560 = vmatpush1.bf16.xpose.msra.mxu0 0
    %1561 = vmatprep.subr.bf16.mxu0 0
    %1562 = vmatpush1.bf16.xpose.msra.mxu0 0
    %1563 = vmatprep.subr.bf16.mxu0 0
    %1564 = vmatpush1.bf16.xpose.msra.mxu0 0
    %1565 = vmatprep.subr.bf16.mxu0 0
    %1566 = vmatpush1.bf16.xpose.msra.mxu0 0
    %1567 = vmatprep.subr.bf16.mxu0 0
    %1568 = vmatpush1.bf16.xpose.msra.mxu0 0
    %1569 = vmatprep.subr.bf16.mxu0 0
    %1570 = vmatpush1.bf16.xpose.msra.mxu0 0
    %1571 = vmatprep.subr.bf16.mxu0 0
    %1572 = vmatpush1.bf16.xpose.msra.mxu0 0
    %1573 = vmatprep.subr.bf16.mxu0 0
    %1574 = vmatpush1.bf16.xpose.msra.mxu0 0
    %1575 = vmatprep.subr.bf16.mxu0 0
    %1576 = vmatpush1.bf16.xpose.msra.mxu0 0
    %1577 = vmatprep.subr.bf16.mxu0 0
    %1578 = vmatpush1.bf16.xpose.msra.mxu0 0
    %1579 = vmatprep.subr.bf16.mxu0 0
    %1580 = vmatpush1.bf16.xpose.msra.mxu0 0
    %1581 = vmatprep.mubr.bf16.mxu0 0
    %1582 = vmatmul.mubr.bf16.gmra.mrb[0].mxu0 %v1544
    %v1583 = vpop.f32.mrb[0].mxu0
    %v1584 = vadd.f32 %v390, %v1583
    %v1585 = vpop.f32.mrb[0].mxu0
    %v1586 = vpop.f32.mrb[0].mxu0
    %v1587 = vpop.f32.mrb[0].mxu0
    %1588 = vdwg.mxu0
    %v1589 = vsel %vm441, %v1584, -inf
    %1590 = vmax.xlane.f32.xlu0 %v1589
    %v1591 = vpop.xlane.xlu0 %1590
    %v1592 = vsub.f32 %v1584, %v1591
    %v1593 = vmul.f32 %v1592, 1.442695
    %v1594 = vpow.pop %v1593
    %v1595 = vsel %vm441, %v1594, 0.0
    %1596 = vadd.xlane.f32.xlu0 %v1595
    %v1597 = vpop.xlane.xlu0 %1596
    %v1598 = vrcp.pop %v1597
    %v1599 = vmul.f32 %v1594, %v1598
    %v1600 = vpack.c.bf16 %v1599, %v1599
    %1601 = vrot.lane.b32.xlu0 %v1078, 32
    %v1602 = vpop.permute.xlu0 %1601
    %v1604 = vsel %vm441, %v1600, 0
    %v1607 = vsel %vm457, %v1602, 0
    %1609 = vmatprep.subr.bf16.mxu0 0
    %1610 = vmatpush1.bf16.msra.mxu0 %v1607
    %1611 = vmatprep.subr.bf16.mxu0 0
    %1612 = vmatpush1.bf16.msra.mxu0 0
    %1613 = vmatprep.subr.bf16.mxu0 0
    %1614 = vmatpush1.bf16.msra.mxu0 0
    %1615 = vmatprep.subr.bf16.mxu0 0
    %1616 = vmatpush1.bf16.msra.mxu0 0
    %1617 = vmatprep.subr.bf16.mxu0 0
    %1618 = vmatpush1.bf16.msra.mxu0 0
    %1619 = vmatprep.subr.bf16.mxu0 0
    %1620 = vmatpush1.bf16.msra.mxu0 0
    %1621 = vmatprep.subr.bf16.mxu0 0
    %1622 = vmatpush1.bf16.msra.mxu0 0
    %1623 = vmatprep.subr.bf16.mxu0 0
    %1624 = vmatpush1.bf16.msra.mxu0 0
    %1625 = vmatprep.subr.bf16.mxu0 0
    %1626 = vmatpush1.bf16.msra.mxu0 0
    %1627 = vmatprep.subr.bf16.mxu0 0
    %1628 = vmatpush1.bf16.msra.mxu0 0
    %1629 = vmatprep.subr.bf16.mxu0 0
    %1630 = vmatpush1.bf16.msra.mxu0 0
    %1631 = vmatprep.subr.bf16.mxu0 0
    %1632 = vmatpush1.bf16.msra.mxu0 0
    %1633 = vmatprep.subr.bf16.mxu0 0
    %1634 = vmatpush1.bf16.msra.mxu0 0
    %1635 = vmatprep.subr.bf16.mxu0 0
    %1636 = vmatpush1.bf16.msra.mxu0 0
    %1637 = vmatprep.subr.bf16.mxu0 0
    %1638 = vmatpush1.bf16.msra.mxu0 0
    %1639 = vmatprep.subr.bf16.mxu0 0
    %1640 = vmatpush1.bf16.msra.mxu0 0
    %1641 = vmatprep.mubr.bf16.mxu0 0
    %1642 = vmatmul.mubr.bf16.gmra.mrb[0].mxu0 %v1604
    %v1643 = vpop.f32.mrb[0].mxu0
    %v1644 = vadd.f32 0.0, %v1643
    %v1645 = vpop.f32.mrb[0].mxu0
    %v1646 = vpop.f32.mrb[0].mxu0
    %v1647 = vpop.f32.mrb[0].mxu0
    %1648 = vdwg.mxu0
    %v1649 = vpack.c.bf16 %v1644, %v1644
    %v1651 = vsel %vm394, %v1649, 0
    %1653 = vmatprep.subr.bf16.mxu0 0
    %1654 = vmatpush1.bf16.msra.mxu0 %v1028
    %1655 = vmatprep.subr.bf16.mxu0 0
    %1656 = vmatpush1.bf16.msra.mxu0 %v1029
    %1657 = vmatprep.subr.bf16.mxu0 0
    %1658 = vmatpush1.bf16.msra.mxu0 0
    %1659 = vmatprep.subr.bf16.mxu0 0
    %1660 = vmatpush1.bf16.msra.mxu0 0
    %1661 = vmatprep.subr.bf16.mxu0 0
    %1662 = vmatpush1.bf16.msra.mxu0 0
    %1663 = vmatprep.subr.bf16.mxu0 0
    %1664 = vmatpush1.bf16.msra.mxu0 0
    %1665 = vmatprep.subr.bf16.mxu0 0
    %1666 = vmatpush1.bf16.msra.mxu0 0
    %1667 = vmatprep.subr.bf16.mxu0 0
    %1668 = vmatpush1.bf16.msra.mxu0 0
    %1669 = vmatprep.subr.bf16.mxu0 0
    %1670 = vmatpush1.bf16.msra.mxu0 0
    %1671 = vmatprep.subr.bf16.mxu0 0
    %1672 = vmatpush1.bf16.msra.mxu0 0
    %1673 = vmatprep.subr.bf16.mxu0 0
    %1674 = vmatpush1.bf16.msra.mxu0 0
    %1675 = vmatprep.subr.bf16.mxu0 0
    %1676 = vmatpush1.bf16.msra.mxu0 0
    %1677 = vmatprep.subr.bf16.mxu0 0
    %1678 = vmatpush1.bf16.msra.mxu0 0
    %1679 = vmatprep.subr.bf16.mxu0 0
    %1680 = vmatpush1.bf16.msra.mxu0 0
    %1681 = vmatprep.subr.bf16.mxu0 0
    %1682 = vmatpush1.bf16.msra.mxu0 0
    %1683 = vmatprep.subr.bf16.mxu0 0
    %1684 = vmatpush1.bf16.msra.mxu0 0
    %1685 = vmatprep.mubr.bf16.mxu0 0
    %1686 = vmatmul.mubr.bf16.gmra.mrb[0].mxu0 %v1651
    %v1687 = vpop.f32.mrb[0].mxu0
    %v1688 = vadd.f32 0.0, %v1687
    %v1689 = vpop.f32.mrb[0].mxu0
    %v1690 = vpop.f32.mrb[0].mxu0
    %v1691 = vpop.f32.mrb[0].mxu0
    %1692 = vdwg.mxu0
    %v1693 = vadd.f32 %v1538, %v1688
    %v1694 = vlaneseq
    %v1695 = vshrl.u32 %v1694, 7
    %v1696 = vsub.s32 0, %v1695
    %v1697 = vrot.slane %v100, %v1696
    %v1698 = vadd.f32 %v1075, %v1697
    %v1699 = vadd.f32 %v1693, %v1697
    %v1700 = vadd.f32 %v96, %v1698
    %v1701 = vadd.f32 %v97, %v1699
    %1702 = vadd.xlane.f32.xlu0 %v1700
    %v1703 = vpop.xlane.xlu0 %1702
    %1704 = vadd.xlane.f32.xlu0 %v1701
    %v1705 = vpop.xlane.xlu0 %1704
    %v1706 = vmul.f32 %v1703, %v109
    %v1707 = vmul.f32 %v1705, %v109
    %v1708 = vsub.f32 %v1700, %v1706
    %v1709 = vsub.f32 %v1701, %v1707
    %v1710 = vmul.f32 %v1708, %v1708
    %v1711 = vmul.f32 %v1709, %v1709
    %1712 = vadd.xlane.f32.xlu0 %v1710
    %v1713 = vpop.xlane.xlu0 %1712
    %1714 = vadd.xlane.f32.xlu0 %v1711
    %v1715 = vpop.xlane.xlu0 %1714
    %v1716 = vmul.f32 %v1713, %v109
    %v1717 = vmul.f32 %v1715, %v109
    %v1718 = vadd.f32 %v1716, 1e-05
    %v1719 = vadd.f32 %v1717, 1e-05
    %v1720 = vrsqrt.pop %v1718
    %v1721 = vrsqrt.pop %v1719
    %v1722 = vmul.f32 %v1708, %v1720
    %v1723 = vmul.f32 %v1709, %v1721
    %v1724 = vlaneseq
    %v1725 = vshrl.u32 %v1724, 7
    %v1726 = vsub.s32 0, %v1725
    %v1727 = vrot.slane %v101, %v1726
    %v1728 = vmul.f32 %v1722, %v1727
    %v1729 = vmul.f32 %v1723, %v1727
    %v1730 = vlaneseq
    %v1731 = vshrl.u32 %v1730, 7
    %v1732 = vsub.s32 0, %v1731
    %v1733 = vrot.slane %v102, %v1732
    %v1734 = vadd.f32 %v1728, %v1733
    %v1735 = vadd.f32 %v1729, %v1733
    %v1736 = vpack.c.bf16 %v1735, %v1734
    %v1737 = vld [vmem:[#allocation8] sm:$0xff]
    %v1738 = vld [vmem:[#allocation8 + $0x8] sm:$0xff]
    %v1739 = vld [vmem:[#allocation8 + $0x10] sm:$0xff]
    %v1740 = vld [vmem:[#allocation8 + $0x18] sm:$0xff]
    %v1741 = vld [vmem:[#allocation8 + $0x20] sm:$0xff]
    %v1742 = vld [vmem:[#allocation8 + $0x28] sm:$0xff]
    %v1743 = vld [vmem:[#allocation8 + $0x30] sm:$0xff]
    %v1744 = vld [vmem:[#allocation8 + $0x38] sm:$0xff]
    %v1745 = vld [vmem:[#allocation8 + $0x40] sm:$0xff]
    %v1746 = vld [vmem:[#allocation8 + $0x48] sm:$0xff]
    %v1747 = vld [vmem:[#allocation8 + $0x50] sm:$0xff]
    %v1748 = vld [vmem:[#allocation8 + $0x58] sm:$0xff]
    %v1749 = vld [vmem:[#allocation8 + $0x60] sm:$0xff]
    %v1750 = vld [vmem:[#allocation8 + $0x68] sm:$0xff]
    %v1751 = vld [vmem:[#allocation8 + $0x70] sm:$0xff]
    %v1752 = vld [vmem:[#allocation8 + $0x78] sm:$0xff]
    %v1753 = vld [vmem:[#allocation8 + $0x80] sm:$0xff]
    %v1754 = vld [vmem:[#allocation8 + $0x88] sm:$0xff]
    %v1755 = vld [vmem:[#allocation8 + $0x90] sm:$0xff]
    %v1756 = vld [vmem:[#allocation8 + $0x98] sm:$0xff]
    %v1757 = vld [vmem:[#allocation8 + $0xa0] sm:$0xff]
    %v1758 = vld [vmem:[#allocation8 + $0xa8] sm:$0xff]
    %v1759 = vld [vmem:[#allocation8 + $0xb0] sm:$0xff]
    %v1760 = vld [vmem:[#allocation8 + $0xb8] sm:$0xff]
    %v1761 = vld [vmem:[#allocation8 + $0xc0] sm:$0xff]
    %v1762 = vld [vmem:[#allocation8 + $0xc8] sm:$0xff]
    %v1763 = vld [vmem:[#allocation8 + $0xd0] sm:$0xff]
    %v1764 = vld [vmem:[#allocation8 + $0xd8] sm:$0xff]
    %v1765 = vld [vmem:[#allocation8 + $0xe0] sm:$0xff]
    %v1766 = vld [vmem:[#allocation8 + $0xe8] sm:$0xff]
    %v1767 = vld [vmem:[#allocation8 + $0xf0] sm:$0xff]
    %v1768 = vld [vmem:[#allocation8 + $0xf8] sm:$0xff]
    %v1770 = vlaneseq
    %v1771 = vshrl.u32 %v1770, 7
    %v1772 = vsub.s32 0, %v1771
    %v1773 = vrot.slane %v104, %v1772
    %v1774 = vlaneseq
    %v1775 = vshrl.u32 %v1774, 7
    %v1776 = vsub.s32 1, %v1775
    %v1777 = vrot.slane %v104, %v1776
    %v1778 = vlaneseq
    %v1779 = vshrl.u32 %v1778, 7
    %v1780 = vsub.s32 2, %v1779
    %v1781 = vrot.slane %v104, %v1780
    %v1782 = vlaneseq
    %v1783 = vshrl.u32 %v1782, 7
    %v1784 = vsub.s32 3, %v1783
    %v1785 = vrot.slane %v104, %v1784
    %v1822 = vunpack.c.l.b16 %v1737
    %v1823 = vunpack.c.h.b16 %v1737
    %v1824 = vunpack.c.l.b16 %v1738
    %v1825 = vunpack.c.h.b16 %v1738
    %v1826 = vunpack.c.l.b16 %v1739
    %v1827 = vunpack.c.h.b16 %v1739
    %v1828 = vunpack.c.l.b16 %v1740
    %v1829 = vunpack.c.h.b16 %v1740
    %v1830 = vunpack.c.l.b16 %v1741
    %v1831 = vunpack.c.h.b16 %v1741
    %v1832 = vunpack.c.l.b16 %v1742
    %v1833 = vunpack.c.h.b16 %v1742
    %v1834 = vunpack.c.l.b16 %v1743
    %v1835 = vunpack.c.h.b16 %v1743
    %v1836 = vunpack.c.l.b16 %v1744
    %v1837 = vunpack.c.h.b16 %v1744
    %v1838 = vunpack.c.l.b16 %v1745
    %v1839 = vunpack.c.h.b16 %v1745
    %v1840 = vunpack.c.l.b16 %v1746
    %v1841 = vunpack.c.h.b16 %v1746
    %v1842 = vunpack.c.l.b16 %v1747
    %v1843 = vunpack.c.h.b16 %v1747
    %v1844 = vunpack.c.l.b16 %v1748
    %v1845 = vunpack.c.h.b16 %v1748
    %v1846 = vunpack.c.l.b16 %v1749
    %v1847 = vunpack.c.h.b16 %v1749
    %v1848 = vunpack.c.l.b16 %v1750
    %v1849 = vunpack.c.h.b16 %v1750
    %v1850 = vunpack.c.l.b16 %v1751
    %v1851 = vunpack.c.h.b16 %v1751
    %v1852 = vunpack.c.l.b16 %v1752
    %v1853 = vunpack.c.h.b16 %v1752
    %v1854 = vunpack.c.l.b16 %v1753
    %v1855 = vunpack.c.h.b16 %v1753
    %v1856 = vunpack.c.l.b16 %v1754
    %v1857 = vunpack.c.h.b16 %v1754
    %v1858 = vunpack.c.l.b16 %v1755
    %v1859 = vunpack.c.h.b16 %v1755
    %v1860 = vunpack.c.l.b16 %v1756
    %v1861 = vunpack.c.h.b16 %v1756
    %v1862 = vunpack.c.l.b16 %v1757
    %v1863 = vunpack.c.h.b16 %v1757
    %v1864 = vunpack.c.l.b16 %v1758
    %v1865 = vunpack.c.h.b16 %v1758
    %v1866 = vunpack.c.l.b16 %v1759
    %v1867 = vunpack.c.h.b16 %v1759
    %v1868 = vunpack.c.l.b16 %v1760
    %v1869 = vunpack.c.h.b16 %v1760
    %v1870 = vunpack.c.l.b16 %v1761
    %v1871 = vunpack.c.h.b16 %v1761
    %v1872 = vunpack.c.l.b16 %v1762
    %v1873 = vunpack.c.h.b16 %v1762
    %v1874 = vunpack.c.l.b16 %v1763
    %v1875 = vunpack.c.h.b16 %v1763
    %v1876 = vunpack.c.l.b16 %v1764
    %v1877 = vunpack.c.h.b16 %v1764
    %v1878 = vunpack.c.l.b16 %v1765
    %v1879 = vunpack.c.h.b16 %v1765
    %v1880 = vunpack.c.l.b16 %v1766
    %v1881 = vunpack.c.h.b16 %v1766
    %v1882 = vunpack.c.l.b16 %v1767
    %v1883 = vunpack.c.h.b16 %v1767
    %v1884 = vunpack.c.l.b16 %v1768
    %v1885 = vunpack.c.h.b16 %v1768
    %v1886 = vpack.c.b16 %v1826, %v1822
    %v1887 = vpack.c.b16 %v1827, %v1823
    %v1888 = vpack.c.b16 %v1828, %v1824
    %v1889 = vpack.c.b16 %v1829, %v1825
    %v1890 = vpack.c.b16 %v1834, %v1830
    %v1891 = vpack.c.b16 %v1835, %v1831
    %v1892 = vpack.c.b16 %v1836, %v1832
    %v1893 = vpack.c.b16 %v1837, %v1833
    %v1894 = vpack.c.b16 %v1842, %v1838
    %v1895 = vpack.c.b16 %v1843, %v1839
    %v1896 = vpack.c.b16 %v1844, %v1840
    %v1897 = vpack.c.b16 %v1845, %v1841
    %v1898 = vpack.c.b16 %v1850, %v1846
    %v1899 = vpack.c.b16 %v1851, %v1847
    %v1900 = vpack.c.b16 %v1852, %v1848
    %v1901 = vpack.c.b16 %v1853, %v1849
    %v1902 = vpack.c.b16 %v1858, %v1854
    %v1903 = vpack.c.b16 %v1859, %v1855
    %v1904 = vpack.c.b16 %v1860, %v1856
    %v1905 = vpack.c.b16 %v1861, %v1857
    %v1906 = vpack.c.b16 %v1866, %v1862
    %v1907 = vpack.c.b16 %v1867, %v1863
    %v1908 = vpack.c.b16 %v1868, %v1864
    %v1909 = vpack.c.b16 %v1869, %v1865
    %v1910 = vpack.c.b16 %v1874, %v1870
    %v1911 = vpack.c.b16 %v1875, %v1871
    %v1912 = vpack.c.b16 %v1876, %v1872
    %v1913 = vpack.c.b16 %v1877, %v1873
    %v1914 = vpack.c.b16 %v1882, %v1878
    %v1915 = vpack.c.b16 %v1883, %v1879
    %v1916 = vpack.c.b16 %v1884, %v1880
    %v1917 = vpack.c.b16 %v1885, %v1881
    %1950 = vmatprep.subr.bf16.mxu0 %v1887
    %1951 = vmatpush1.bf16.msra.mxu0 %v1886
    %1952 = vmatprep.subr.bf16.mxu0 %v1891
    %1953 = vmatpush1.bf16.msra.mxu0 %v1890
    %1954 = vmatprep.subr.bf16.mxu0 %v1895
    %1955 = vmatpush1.bf16.msra.mxu0 %v1894
    %1956 = vmatprep.subr.bf16.mxu0 %v1899
    %1957 = vmatpush1.bf16.msra.mxu0 %v1898
    %1958 = vmatprep.subr.bf16.mxu0 %v1903
    %1959 = vmatpush1.bf16.msra.mxu0 %v1902
    %1960 = vmatprep.subr.bf16.mxu0 %v1907
    %1961 = vmatpush1.bf16.msra.mxu0 %v1906
    %1962 = vmatprep.subr.bf16.mxu0 %v1911
    %1963 = vmatpush1.bf16.msra.mxu0 %v1910
    %1964 = vmatprep.subr.bf16.mxu0 %v1915
    %1965 = vmatpush1.bf16.msra.mxu0 %v1914
    %1966 = vmatprep.subr.bf16.mxu0 0
    %1967 = vmatpush1.bf16.msra.mxu0 0
    %1968 = vmatprep.subr.bf16.mxu0 0
    %1969 = vmatpush1.bf16.msra.mxu0 0
    %1970 = vmatprep.subr.bf16.mxu0 0
    %1971 = vmatpush1.bf16.msra.mxu0 0
    %1972 = vmatprep.subr.bf16.mxu0 0
    %1973 = vmatpush1.bf16.msra.mxu0 0
    %1974 = vmatprep.subr.bf16.mxu0 0
    %1975 = vmatpush1.bf16.msra.mxu0 0
    %1976 = vmatprep.subr.bf16.mxu0 0
    %1977 = vmatpush1.bf16.msra.mxu0 0
    %1978 = vmatprep.subr.bf16.mxu0 0
    %1979 = vmatpush1.bf16.msra.mxu0 0
    %1980 = vmatprep.subr.bf16.mxu0 0
    %1981 = vmatpush1.bf16.msra.mxu0 0
    %1982 = vmatprep.mubr.bf16.mxu0 0
    %1983 = vmatmul.mubr.bf16.gmra.mrb[0].mxu0 %v1736
    %v1984 = vpop.f32.mrb[0].mxu0
    %v1985 = vadd.f32 %v1773, %v1984
    %v1986 = vpop.f32.mrb[0].mxu0
    %v1987 = vadd.f32 %v1777, %v1986
    %v1988 = vpop.f32.mrb[0].mxu0
    %v1989 = vadd.f32 %v1773, %v1988
    %v1990 = vpop.f32.mrb[0].mxu0
    %v1991 = vadd.f32 %v1777, %v1990
    %1992 = vdwg.mxu0
    %1993 = vmatprep.subr.bf16.mxu0 %v1889
    %1994 = vmatpush1.bf16.msra.mxu0 %v1888
    %1995 = vmatprep.subr.bf16.mxu0 %v1893
    %1996 = vmatpush1.bf16.msra.mxu0 %v1892
    %1997 = vmatprep.subr.bf16.mxu0 %v1897
    %1998 = vmatpush1.bf16.msra.mxu0 %v1896
    %1999 = vmatprep.subr.bf16.mxu0 %v1901
    %2000 = vmatpush1.bf16.msra.mxu0 %v1900
    %2001 = vmatprep.subr.bf16.mxu0 %v1905
    %2002 = vmatpush1.bf16.msra.mxu0 %v1904
    %2003 = vmatprep.subr.bf16.mxu0 %v1909
    %2004 = vmatpush1.bf16.msra.mxu0 %v1908
    %2005 = vmatprep.subr.bf16.mxu0 %v1913
    %2006 = vmatpush1.bf16.msra.mxu0 %v1912
    %2007 = vmatprep.subr.bf16.mxu0 %v1917
    %2008 = vmatpush1.bf16.msra.mxu0 %v1916
    %2009 = vmatprep.subr.bf16.mxu0 0
    %2010 = vmatpush1.bf16.msra.mxu0 0
    %2011 = vmatprep.subr.bf16.mxu0 0
    %2012 = vmatpush1.bf16.msra.mxu0 0
    %2013 = vmatprep.subr.bf16.mxu0 0
    %2014 = vmatpush1.bf16.msra.mxu0 0
    %2015 = vmatprep.subr.bf16.mxu0 0
    %2016 = vmatpush1.bf16.msra.mxu0 0
    %2017 = vmatprep.subr.bf16.mxu0 0
    %2018 = vmatpush1.bf16.msra.mxu0 0
    %2019 = vmatprep.subr.bf16.mxu0 0
    %2020 = vmatpush1.bf16.msra.mxu0 0
    %2021 = vmatprep.subr.bf16.mxu0 0
    %2022 = vmatpush1.bf16.msra.mxu0 0
    %2023 = vmatprep.subr.bf16.mxu0 0
    %2024 = vmatpush1.bf16.msra.mxu0 0
    %2025 = vmatprep.mubr.bf16.mxu0 0
    %2026 = vmatmul.mubr.bf16.gmra.mrb[0].mxu0 %v1736
    %v2027 = vpop.f32.mrb[0].mxu0
    %v2028 = vadd.f32 %v1781, %v2027
    %v2029 = vpop.f32.mrb[0].mxu0
    %v2030 = vadd.f32 %v1785, %v2029
    %v2031 = vpop.f32.mrb[0].mxu0
    %v2032 = vadd.f32 %v1781, %v2031
    %v2033 = vpop.f32.mrb[0].mxu0
    %v2034 = vadd.f32 %v1785, %v2033
    %2035 = vdwg.mxu0
    %v2036 = vmax.f32 %v1985, 0.0
    %v2037 = vmax.f32 %v1987, 0.0
    %v2038 = vmax.f32 %v2028, 0.0
    %v2039 = vmax.f32 %v2030, 0.0
    %v2040 = vmax.f32 %v1989, 0.0
    %v2041 = vmax.f32 %v1991, 0.0
    %v2042 = vmax.f32 %v2032, 0.0
    %v2043 = vmax.f32 %v2034, 0.0
    %v2044 = vpack.c.bf16 %v2040, %v2036
    %v2045 = vpack.c.bf16 %v2041, %v2037
    %v2046 = vpack.c.bf16 %v2042, %v2038
    %v2047 = vpack.c.bf16 %v2043, %v2039
    %v2048 = vld [vmem:[#allocation10] sm:$0xf]
    %v2049 = vld [vmem:[#allocation10 + $0x4] sm:$0xf]
    %v2050 = vld [vmem:[#allocation10 + $0x8] sm:$0xf]
    %v2051 = vld [vmem:[#allocation10 + $0xc] sm:$0xf]
    %v2052 = vld [vmem:[#allocation10 + $0x10] sm:$0xf]
    %v2053 = vld [vmem:[#allocation10 + $0x14] sm:$0xf]
    %v2054 = vld [vmem:[#allocation10 + $0x18] sm:$0xf]
    %v2055 = vld [vmem:[#allocation10 + $0x1c] sm:$0xf]
    %v2056 = vld [vmem:[#allocation10 + $0x20] sm:$0xf]
    %v2057 = vld [vmem:[#allocation10 + $0x24] sm:$0xf]
    %v2058 = vld [vmem:[#allocation10 + $0x28] sm:$0xf]
    %v2059 = vld [vmem:[#allocation10 + $0x2c] sm:$0xf]
    %v2060 = vld [vmem:[#allocation10 + $0x30] sm:$0xf]
    %v2061 = vld [vmem:[#allocation10 + $0x34] sm:$0xf]
    %v2062 = vld [vmem:[#allocation10 + $0x38] sm:$0xf]
    %v2063 = vld [vmem:[#allocation10 + $0x3c] sm:$0xf]
    %v2064 = vld [vmem:[#allocation10 + $0x40] sm:$0xf]
    %v2065 = vld [vmem:[#allocation10 + $0x44] sm:$0xf]
    %v2066 = vld [vmem:[#allocation10 + $0x48] sm:$0xf]
    %v2067 = vld [vmem:[#allocation10 + $0x4c] sm:$0xf]
    %v2068 = vld [vmem:[#allocation10 + $0x50] sm:$0xf]
    %v2069 = vld [vmem:[#allocation10 + $0x54] sm:$0xf]
    %v2070 = vld [vmem:[#allocation10 + $0x58] sm:$0xf]
    %v2071 = vld [vmem:[#allocation10 + $0x5c] sm:$0xf]
    %v2072 = vld [vmem:[#allocation10 + $0x60] sm:$0xf]
    %v2073 = vld [vmem:[#allocation10 + $0x64] sm:$0xf]
    %v2074 = vld [vmem:[#allocation10 + $0x68] sm:$0xf]
    %v2075 = vld [vmem:[#allocation10 + $0x6c] sm:$0xf]
    %v2076 = vld [vmem:[#allocation10 + $0x70] sm:$0xf]
    %v2077 = vld [vmem:[#allocation10 + $0x74] sm:$0xf]
    %v2078 = vld [vmem:[#allocation10 + $0x78] sm:$0xf]
    %v2079 = vld [vmem:[#allocation10 + $0x7c] sm:$0xf]
    %v2080 = vld [vmem:[#allocation10 + $0x80] sm:$0xf]
    %v2081 = vld [vmem:[#allocation10 + $0x84] sm:$0xf]
    %v2082 = vld [vmem:[#allocation10 + $0x88] sm:$0xf]
    %v2083 = vld [vmem:[#allocation10 + $0x8c] sm:$0xf]
    %v2084 = vld [vmem:[#allocation10 + $0x90] sm:$0xf]
    %v2085 = vld [vmem:[#allocation10 + $0x94] sm:$0xf]
    %v2086 = vld [vmem:[#allocation10 + $0x98] sm:$0xf]
    %v2087 = vld [vmem:[#allocation10 + $0x9c] sm:$0xf]
    %v2088 = vld [vmem:[#allocation10 + $0xa0] sm:$0xf]
    %v2089 = vld [vmem:[#allocation10 + $0xa4] sm:$0xf]
    %v2090 = vld [vmem:[#allocation10 + $0xa8] sm:$0xf]
    %v2091 = vld [vmem:[#allocation10 + $0xac] sm:$0xf]
    %v2092 = vld [vmem:[#allocation10 + $0xb0] sm:$0xf]
    %v2093 = vld [vmem:[#allocation10 + $0xb4] sm:$0xf]
    %v2094 = vld [vmem:[#allocation10 + $0xb8] sm:$0xf]
    %v2095 = vld [vmem:[#allocation10 + $0xbc] sm:$0xf]
    %v2096 = vld [vmem:[#allocation10 + $0xc0] sm:$0xf]
    %v2097 = vld [vmem:[#allocation10 + $0xc4] sm:$0xf]
    %v2098 = vld [vmem:[#allocation10 + $0xc8] sm:$0xf]
    %v2099 = vld [vmem:[#allocation10 + $0xcc] sm:$0xf]
    %v2100 = vld [vmem:[#allocation10 + $0xd0] sm:$0xf]
    %v2101 = vld [vmem:[#allocation10 + $0xd4] sm:$0xf]
    %v2102 = vld [vmem:[#allocation10 + $0xd8] sm:$0xf]
    %v2103 = vld [vmem:[#allocation10 + $0xdc] sm:$0xf]
    %v2104 = vld [vmem:[#allocation10 + $0xe0] sm:$0xf]
    %v2105 = vld [vmem:[#allocation10 + $0xe4] sm:$0xf]
    %v2106 = vld [vmem:[#allocation10 + $0xe8] sm:$0xf]
    %v2107 = vld [vmem:[#allocation10 + $0xec] sm:$0xf]
    %v2108 = vld [vmem:[#allocation10 + $0xf0] sm:$0xf]
    %v2109 = vld [vmem:[#allocation10 + $0xf4] sm:$0xf]
    %v2110 = vld [vmem:[#allocation10 + $0xf8] sm:$0xf]
    %v2111 = vld [vmem:[#allocation10 + $0xfc] sm:$0xf]
    %v2112 = vlaneseq
    %v2113 = vshrl.u32 %v2112, 7
    %v2114 = vsub.s32 0, %v2113
    %v2115 = vrot.slane %v103, %v2114
    %v2180 = vunpack.c.l.b16 %v2048
    %v2181 = vunpack.c.l.b16 %v2049
    %v2182 = vunpack.c.l.b16 %v2050
    %v2183 = vunpack.c.l.b16 %v2051
    %v2184 = vunpack.c.l.b16 %v2052
    %v2185 = vunpack.c.l.b16 %v2053
    %v2186 = vunpack.c.l.b16 %v2054
    %v2187 = vunpack.c.l.b16 %v2055
    %v2188 = vunpack.c.l.b16 %v2056
    %v2189 = vunpack.c.l.b16 %v2057
    %v2190 = vunpack.c.l.b16 %v2058
    %v2191 = vunpack.c.l.b16 %v2059
    %v2192 = vunpack.c.l.b16 %v2060
    %v2193 = vunpack.c.l.b16 %v2061
    %v2194 = vunpack.c.l.b16 %v2062
    %v2195 = vunpack.c.l.b16 %v2063
    %v2196 = vunpack.c.l.b16 %v2064
    %v2197 = vunpack.c.l.b16 %v2065
    %v2198 = vunpack.c.l.b16 %v2066
    %v2199 = vunpack.c.l.b16 %v2067
    %v2200 = vunpack.c.l.b16 %v2068
    %v2201 = vunpack.c.l.b16 %v2069
    %v2202 = vunpack.c.l.b16 %v2070
    %v2203 = vunpack.c.l.b16 %v2071
    %v2204 = vunpack.c.l.b16 %v2072
    %v2205 = vunpack.c.l.b16 %v2073
    %v2206 = vunpack.c.l.b16 %v2074
    %v2207 = vunpack.c.l.b16 %v2075
    %v2208 = vunpack.c.l.b16 %v2076
    %v2209 = vunpack.c.l.b16 %v2077
    %v2210 = vunpack.c.l.b16 %v2078
    %v2211 = vunpack.c.l.b16 %v2079
    %v2212 = vunpack.c.l.b16 %v2080
    %v2213 = vunpack.c.l.b16 %v2081
    %v2214 = vunpack.c.l.b16 %v2082
    %v2215 = vunpack.c.l.b16 %v2083
    %v2216 = vunpack.c.l.b16 %v2084
    %v2217 = vunpack.c.l.b16 %v2085
    %v2218 = vunpack.c.l.b16 %v2086
    %v2219 = vunpack.c.l.b16 %v2087
    %v2220 = vunpack.c.l.b16 %v2088
    %v2221 = vunpack.c.l.b16 %v2089
    %v2222 = vunpack.c.l.b16 %v2090
    %v2223 = vunpack.c.l.b16 %v2091
    %v2224 = vunpack.c.l.b16 %v2092
    %v2225 = vunpack.c.l.b16 %v2093
    %v2226 = vunpack.c.l.b16 %v2094
    %v2227 = vunpack.c.l.b16 %v2095
    %v2228 = vunpack.c.l.b16 %v2096
    %v2229 = vunpack.c.l.b16 %v2097
    %v2230 = vunpack.c.l.b16 %v2098
    %v2231 = vunpack.c.l.b16 %v2099
    %v2232 = vunpack.c.l.b16 %v2100
    %v2233 = vunpack.c.l.b16 %v2101
    %v2234 = vunpack.c.l.b16 %v2102
    %v2235 = vunpack.c.l.b16 %v2103
    %v2236 = vunpack.c.l.b16 %v2104
    %v2237 = vunpack.c.l.b16 %v2105
    %v2238 = vunpack.c.l.b16 %v2106
    %v2239 = vunpack.c.l.b16 %v2107
    %v2240 = vunpack.c.l.b16 %v2108
    %v2241 = vunpack.c.l.b16 %v2109
    %v2242 = vunpack.c.l.b16 %v2110
    %v2243 = vunpack.c.l.b16 %v2111
    %v2244 = vpack.c.b16 %v2181, %v2180
    %v2245 = vpack.c.b16 %v2183, %v2182
    %v2246 = vpack.c.b16 %v2185, %v2184
    %v2247 = vpack.c.b16 %v2187, %v2186
    %v2248 = vpack.c.b16 %v2189, %v2188
    %v2249 = vpack.c.b16 %v2191, %v2190
    %v2250 = vpack.c.b16 %v2193, %v2192
    %v2251 = vpack.c.b16 %v2195, %v2194
    %v2252 = vpack.c.b16 %v2197, %v2196
    %v2253 = vpack.c.b16 %v2199, %v2198
    %v2254 = vpack.c.b16 %v2201, %v2200
    %v2255 = vpack.c.b16 %v2203, %v2202
    %v2256 = vpack.c.b16 %v2205, %v2204
    %v2257 = vpack.c.b16 %v2207, %v2206
    %v2258 = vpack.c.b16 %v2209, %v2208
    %v2259 = vpack.c.b16 %v2211, %v2210
    %v2260 = vpack.c.b16 %v2213, %v2212
    %v2261 = vpack.c.b16 %v2215, %v2214
    %v2262 = vpack.c.b16 %v2217, %v2216
    %v2263 = vpack.c.b16 %v2219, %v2218
    %v2264 = vpack.c.b16 %v2221, %v2220
    %v2265 = vpack.c.b16 %v2223, %v2222
    %v2266 = vpack.c.b16 %v2225, %v2224
    %v2267 = vpack.c.b16 %v2227, %v2226
    %v2268 = vpack.c.b16 %v2229, %v2228
    %v2269 = vpack.c.b16 %v2231, %v2230
    %v2270 = vpack.c.b16 %v2233, %v2232
    %v2271 = vpack.c.b16 %v2235, %v2234
    %v2272 = vpack.c.b16 %v2237, %v2236
    %v2273 = vpack.c.b16 %v2239, %v2238
    %v2274 = vpack.c.b16 %v2241, %v2240
    %v2275 = vpack.c.b16 %v2243, %v2242
    %2308 = vmatprep.subr.bf16.mxu0 0
    %2309 = vmatpush1.bf16.msra.mxu0 %v2244
    %2310 = vmatprep.subr.bf16.mxu0 0
    %2311 = vmatpush1.bf16.msra.mxu0 %v2245
    %2312 = vmatprep.subr.bf16.mxu0 0
    %2313 = vmatpush1.bf16.msra.mxu0 %v2246
    %2314 = vmatprep.subr.bf16.mxu0 0
    %2315 = vmatpush1.bf16.msra.mxu0 %v2247
    %2316 = vmatprep.subr.bf16.mxu0 0
    %2317 = vmatpush1.bf16.msra.mxu0 %v2248
    %2318 = vmatprep.subr.bf16.mxu0 0
    %2319 = vmatpush1.bf16.msra.mxu0 %v2249
    %2320 = vmatprep.subr.bf16.mxu0 0
    %2321 = vmatpush1.bf16.msra.mxu0 %v2250
    %2322 = vmatprep.subr.bf16.mxu0 0
    %2323 = vmatpush1.bf16.msra.mxu0 %v2251
    %2324 = vmatprep.subr.bf16.mxu0 0
    %2325 = vmatpush1.bf16.msra.mxu0 %v2252
    %2326 = vmatprep.subr.bf16.mxu0 0
    %2327 = vmatpush1.bf16.msra.mxu0 %v2253
    %2328 = vmatprep.subr.bf16.mxu0 0
    %2329 = vmatpush1.bf16.msra.mxu0 %v2254
    %2330 = vmatprep.subr.bf16.mxu0 0
    %2331 = vmatpush1.bf16.msra.mxu0 %v2255
    %2332 = vmatprep.subr.bf16.mxu0 0
    %2333 = vmatpush1.bf16.msra.mxu0 %v2256
    %2334 = vmatprep.subr.bf16.mxu0 0
    %2335 = vmatpush1.bf16.msra.mxu0 %v2257
    %2336 = vmatprep.subr.bf16.mxu0 0
    %2337 = vmatpush1.bf16.msra.mxu0 %v2258
    %2338 = vmatprep.subr.bf16.mxu0 0
    %2339 = vmatpush1.bf16.msra.mxu0 %v2259
    %2340 = vmatprep.mubr.bf16.mxu0 %v2045
    %2341 = vmatmul.mubr.bf16.gmra.mrb[0].mxu0 %v2044
    %v2342 = vpop.f32.mrb[0].mxu0
    %v2343 = vadd.f32 %v2115, %v2342
    %v2344 = vpop.f32.mrb[0].mxu0
    %v2345 = vpop.f32.mrb[0].mxu0
    %v2346 = vadd.f32 %v2115, %v2345
    %v2347 = vpop.f32.mrb[0].mxu0
    %2348 = vdwg.mxu0
    %2349 = vmatprep.subr.bf16.mxu0 0
    %2350 = vmatpush1.bf16.msra.mxu0 %v2260
    %2351 = vmatprep.subr.bf16.mxu0 0
    %2352 = vmatpush1.bf16.msra.mxu0 %v2261
    %2353 = vmatprep.subr.bf16.mxu0 0
    %2354 = vmatpush1.bf16.msra.mxu0 %v2262
    %2355 = vmatprep.subr.bf16.mxu0 0
    %2356 = vmatpush1.bf16.msra.mxu0 %v2263
    %2357 = vmatprep.subr.bf16.mxu0 0
    %2358 = vmatpush1.bf16.msra.mxu0 %v2264
    %2359 = vmatprep.subr.bf16.mxu0 0
    %2360 = vmatpush1.bf16.msra.mxu0 %v2265
    %2361 = vmatprep.subr.bf16.mxu0 0
    %2362 = vmatpush1.bf16.msra.mxu0 %v2266
    %2363 = vmatprep.subr.bf16.mxu0 0
    %2364 = vmatpush1.bf16.msra.mxu0 %v2267
    %2365 = vmatprep.subr.bf16.mxu0 0
    %2366 = vmatpush1.bf16.msra.mxu0 %v2268
    %2367 = vmatprep.subr.bf16.mxu0 0
    %2368 = vmatpush1.bf16.msra.mxu0 %v2269
    %2369 = vmatprep.subr.bf16.mxu0 0
    %2370 = vmatpush1.bf16.msra.mxu0 %v2270
    %2371 = vmatprep.subr.bf16.mxu0 0
    %2372 = vmatpush1.bf16.msra.mxu0 %v2271
    %2373 = vmatprep.subr.bf16.mxu0 0
    %2374 = vmatpush1.bf16.msra.mxu0 %v2272
    %2375 = vmatprep.subr.bf16.mxu0 0
    %2376 = vmatpush1.bf16.msra.mxu0 %v2273
    %2377 = vmatprep.subr.bf16.mxu0 0
    %2378 = vmatpush1.bf16.msra.mxu0 %v2274
    %2379 = vmatprep.subr.bf16.mxu0 0
    %2380 = vmatpush1.bf16.msra.mxu0 %v2275
    %2381 = vmatprep.mubr.bf16.mxu0 %v2047
    %2382 = vmatmul.mubr.bf16.gmra.mrb[0].mxu0 %v2046
    %v2383 = vpop.f32.mrb[0].mxu0
    %v2384 = vadd.f32 %v2343, %v2383
    %v2385 = vpop.f32.mrb[0].mxu0
    %v2386 = vpop.f32.mrb[0].mxu0
    %v2387 = vadd.f32 %v2346, %v2386
    %v2388 = vpop.f32.mrb[0].mxu0
    %2389 = vdwg.mxu0
    %v2390 = vadd.f32 %v1700, %v2384
    %v2391 = vadd.f32 %v1701, %v2387
    %2392 = vst [vmem:[#allocation11] sm:$0xff] %v2390
    %2393 = vst [vmem:[#allocation11 + $0x8] sm:$0xff] %v2391
    // Predicated region
    $region50: #{tpu_custom_call.1} parent=1 // pred_check
      _
    $region51: #{tpu_custom_call.1} parent=1 // pred_check_branch
      %2395 = sbr.rel (0) target = $region53
    $region52: #{tpu_custom_call.1} parent=1 // pred_region
      %s2397 = ssub.s32 256, 256
      %2398 = vsyncadd [#allocation4], %s2397
      %s2399 = sshll.u32 [#allocation11], 4
      %s2400 = int_to_ptr.vmem [resolvable:$true] %s2399
      %2405 = dma.vmem_to_hbm [thread:$0]  %s2400, 256, %s7, [#allocation4], 128, 128, 8
    $region53: #{tpu_custom_call.1} parent=1 // pred_fallthru
      _
    // Predicated region
    $region54: #{tpu_custom_call.1} parent=1 // pred_check
      _
    $region55: #{tpu_custom_call.1} parent=1 // pred_check_branch
      %2407 = sbr.rel (0) target = $region57
    $region56: #{tpu_custom_call.1} parent=1 // pred_region
      %2408 = dma.done [#allocation4], 256
    $region57: #{tpu_custom_call.1} parent=1 // pred_fallthru
      _
    %2409 = vsyncpa [#allocation3], 1
    %2410 = vsyncpa [#allocation6], 1
    %2411 = vsyncpa [#allocation9], 1
    %2412 = vsyncpa [#allocation4], 1

</llo_original>
